<compile_context>
chip_gen: v6e
topology: v6e:2x2x1
jax: 0.10.0
libtpu: 0.0.40
codegen_flags: <defaults>
</compile_context>

<pallas_src>
import functools

import jax
import jax.numpy as jnp
from jax.experimental import pallas as pl
from jax.experimental.pallas import tpu as pltpu

_F_CHUNK = 512          # lane-aligned FFN tile over dim_feedforward
_NEG_INF = -1e30        # cross-batch mask value (exp underflows to exactly 0)

_WEIGHT_NAMES = ('wq', 'bq', 'wk', 'bk', 'wv', 'bv', 'wo', 'bo',
                 'w1', 'b1', 'w2', 'b2', 'g1', 'be1', 'g2', 'be2', 'wfc', 'bfc')


def _layer_norm(x, gamma, beta, eps=1e-5):
    # Two-pass layernorm (safer than E[x^2] - mean^2; negligible cost here).
    mean = jnp.mean(x, axis=-1, keepdims=True)
    xc = x - mean
    var = jnp.mean(xc * xc, axis=-1, keepdims=True)
    return xc * jax.lax.rsqrt(var + eps) * gamma + beta


def transformer_kernel(x_ref,
                       wq_ref, bq_ref, wk_ref, bk_ref, wv_ref, bv_ref,
                       wo_ref, bo_ref,
                       w1_ref, b1_ref, w2_ref, b2_ref,
                       g1_ref, be1_ref, g2_ref, be2_ref,
                       wfc_ref, bfc_ref,
                       out_ref, *, batch):
    # x_ref block is (N_tok, E), token t = s*batch + b (free reshape of (S, B, E)).
    x = x_ref[...]                                        # (N, E) f32
    n_tok = x.shape[0]
    xb = x.astype(jnp.bfloat16)

    def proj(a_bf16, w_ref, b_ref):
        return jnp.dot(a_bf16, w_ref[...],
                       preferred_element_type=jnp.float32) + b_ref[...]

    # ---- Q/K/V projections (un-fused: lane-safe when E % 128 != 0; scale folded in Q) --
    q = proj(xb, wq_ref, bq_ref)                          # (N, E) f32
    k = proj(xb, wk_ref, bk_ref)
    v = proj(xb, wv_ref, bv_ref)

    # ---- attention over packed tokens: NT dot (no K transpose), same-batch mask --------
    scores = jax.lax.dot_general(
        q.astype(jnp.bfloat16), k.astype(jnp.bfloat16),
        (((1,), (1,)), ((), ())), preferred_element_type=jnp.float32)    # (N, N)
    row_b = jax.lax.broadcasted_iota(jnp.int32, (n_tok, n_tok), 0) % batch
    col_b = jax.lax.broadcasted_iota(jnp.int32, (n_tok, n_tok), 1) % batch
    scores = jnp.where(row_b == col_b, scores, _NEG_INF)

    m = jnp.max(scores, axis=-1, keepdims=True)
    p = jnp.exp(scores - m)
    denom = jnp.sum(p, axis=-1, keepdims=True)
    p = p * pl.reciprocal(denom, approx=True)             # EUP; ~1e-3 rel vs exact divide

    attn = jnp.dot(p.astype(jnp.bfloat16), v.astype(jnp.bfloat16),
                   preferred_element_type=jnp.float32)                   # (N, E)
    attn = proj(attn.astype(jnp.bfloat16), wo_ref, bo_ref)

    # TODO(synk): dropout layers are identity here (eval-mode semantics).
    x1 = _layer_norm(x + attn, g1_ref[...], be1_ref[...])

    # ---- feed-forward (relu, F=2048), tiled over lane-aligned F chunks ------------------
    x1b = x1.astype(jnp.bfloat16)
    f_dim = w1_ref.shape[1]
    ff = jnp.zeros_like(x1)
    for c0 in range(0, f_dim, _F_CHUNK):                  # static unroll (4 chunks @ 2048)
        c1 = min(c0 + _F_CHUNK, f_dim)
        h = jnp.dot(x1b, w1_ref[:, c0:c1],
                    preferred_element_type=jnp.float32) + b1_ref[:, c0:c1]
        h = jnp.maximum(h, 0.0)                           # relu in f32
        # w2 stored lane-dense as (E, F); contract the F axes (NT) — no transpose.
        ff = ff + jax.lax.dot_general(
            h.astype(jnp.bfloat16), w2_ref[:, c0:c1],
            (((1,), (1,)), ((), ())), preferred_element_type=jnp.float32)
    ff = ff + b2_ref[...]

    x2 = _layer_norm(x1 + ff, g2_ref[...], be2_ref[...])

    # ---- final linear (lane-padded to 128 outputs) + sigmoid ----------------------------
    y = jnp.dot(x2.astype(jnp.bfloat16), wfc_ref[...],
                preferred_element_type=jnp.float32) + bfc_ref[...]       # (N, O_pad)
    out_ref[...] = jax.nn.sigmoid(y).astype(out_ref.dtype)


def simple_transformer_forward(x_sbe, params):
    """x_sbe: (S, B, E) like the PyTorch module (batch_first=False).
    Returns (S, B, output_dim)."""
    S, B, E = x_sbe.shape
    O = params['out_dim']
    O_pad = params['wfc'].shape[1]
    n_tok = S * B

    # Free, layout-preserving merge (row-major contiguous) — no transpose, no HBM copy.
    x_tok = x_sbe.reshape(n_tok, E)

    weights = tuple(params[n] for n in _WEIGHT_NAMES)
    in_specs = [pl.BlockSpec((n_tok, E), lambda i: (0, 0))]
    for w in weights:
        in_specs.append(pl.BlockSpec(w.shape, lambda i: (0, 0)))

    out = pl.pallas_call(
        functools.partial(transformer_kernel, batch=B),
        out_shape=jax.ShapeDtypeStruct((n_tok, O_pad), jnp.float32),
        grid=(1,),                                # all S*B tokens packed into one step
        in_specs=in_specs,
        out_specs=pl.BlockSpec((n_tok, O_pad), lambda i: (0, 0)),
        compiler_params=pltpu.CompilerParams(
            dimension_semantics=("arbitrary",),
            vmem_limit_bytes=32 << 20),
    )(x_tok, *weights)

    return out[:, :O].reshape(S, B, O)            # drop lane padding; free reshape back


def init_params(key, input_dim, output_dim, dim_feedforward=2048):
    """Deterministic synthetic parameters, pre-transformed to kernel layout."""
    E = input_dim
    ks = jax.random.split(key, 10)

    def w(k, shape):
        scale = 1.0 / jnp.sqrt(jnp.float32(shape[-1]))
        return jax.random.uniform(k, shape, jnp.float32, -1.0, 1.0) * scale

    # PyTorch-layout parameters.
    in_proj_w = w(ks[0], (3 * E, E))                      # MultiheadAttention in_proj_weight
    in_proj_b = w(ks[1], (3 * E,))
    wo = w(ks[2], (E, E));               bo = w(ks[3], (E,))
    w1 = w(ks[4], (dim_feedforward, E)); b1 = w(ks[5], (dim_feedforward,))
    w2 = w(ks[6], (E, dim_feedforward)); b2 = w(ks[7], (E,))
    wfc = w(ks[8], (output_dim, E));     bfc = w(ks[9], (output_dim,))

    # Fold the 1/sqrt(E) attention scale into the Q projection (host-side, free).
    scale = 1.0 / jnp.sqrt(jnp.float32(E))
    wq_t = (in_proj_w[:E] * scale).T                      # (E, E)
    bq = (in_proj_b[:E] * scale).reshape(1, E)
    wk_t = in_proj_w[E:2 * E].T
    bk = in_proj_b[E:2 * E].reshape(1, E)
    wv_t = in_proj_w[2 * E:].T
    bv = in_proj_b[2 * E:].reshape(1, E)

    # Lane-dense final FC: pad output_dim up to a multiple of 128.
    O_pad = max(128, ((output_dim + 127) // 128) * 128)
    wfc_pad = jnp.zeros((O_pad, E), jnp.float32).at[:output_dim].set(wfc)
    bfc_pad = jnp.zeros((O_pad,), jnp.float32).at[:output_dim].set(bfc)

    mm = jnp.bfloat16   # MXU operand dtype (weights stored pre-cast)
    return dict(
        wq=wq_t.astype(mm), bq=bq,
        wk=wk_t.astype(mm), bk=bk,
        wv=wv_t.astype(mm), bv=bv,
        wo=wo.T.astype(mm), bo=bo.reshape(1, E),
        w1=w1.T.astype(mm), b1=b1.reshape(1, dim_feedforward),   # (E, F) lane-dense
        w2=w2.astype(mm),   b2=b2.reshape(1, E),                 # (E, F) lane-dense, NT
        g1=jnp.ones((1, E), jnp.float32),  be1=jnp.zeros((1, E), jnp.float32),
        g2=jnp.ones((1, E), jnp.float32),  be2=jnp.zeros((1, E), jnp.float32),
        wfc=wfc_pad.T.astype(mm),                                # (E, O_pad)
        bfc=bfc_pad.reshape(1, O_pad),
        out_dim=output_dim,
    )


def reference_forward(x_sbe, params):
    """Pure-JAX reference mirroring the kernel's bf16-matmul / f32-elementwise numerics."""
    S, B, E = x_sbe.shape
    f32 = jnp.float32

    def mm(a, w_):
        return jnp.dot(a.astype(jnp.bfloat16), w_, preferred_element_type=f32)

    x = x_sbe.reshape(S * B, E)
    q = mm(x, params['wq']) + params['bq']
    k = mm(x, params['wk']) + params['bk']
    v = mm(x, params['wv']) + params['bv']
    q3, k3, v3 = (t.reshape(S, B, E) for t in (q, k, v))
    s = jnp.einsum('sbe,tbe->bst', q3.astype(jnp.bfloat16), k3.astype(jnp.bfloat16),
                   preferred_element_type=f32)
    p = jax.nn.softmax(s, axis=-1)
    a3 = jnp.einsum('bst,tbe->sbe', p.astype(jnp.bfloat16), v3.astype(jnp.bfloat16),
                    preferred_element_type=f32)
    attn = mm(a3.reshape(S * B, E), params['wo']) + params['bo']

    def ln(z, g, b):
        mu = jnp.mean(z, -1, keepdims=True)
        zc = z - mu
        var = jnp.mean(zc * zc, -1, keepdims=True)
        return zc * jax.lax.rsqrt(var + 1e-5) * g + b

    x1 = ln(x + attn, params['g1'], params['be1'])
    h = jnp.maximum(mm(x1, params['w1']) + params['b1'], 0.0)
    ff = jnp.dot(h.astype(jnp.bfloat16), params['w2'].T,
                 preferred_element_type=f32) + params['b2']
    x2 = ln(x1 + ff, params['g2'], params['be2'])
    y = jax.nn.sigmoid(mm(x2, params['wfc']) + params['bfc'])
    O = params['out_dim']
    return y[:, :O].reshape(S, B, O)


if __name__ == "__main__":
    INPUT_DIM, HIDDEN_DIM, OUTPUT_DIM = 16, 32, 1        # HIDDEN_DIM unused by forward
    SEQ, BATCH = 8, 2

    key = jax.random.PRNGKey(0)
    kx, kp = jax.random.split(key)
    x = jax.random.normal(kx, (SEQ, BATCH, INPUT_DIM), jnp.float32)
    params = init_params(kp, INPUT_DIM, OUTPUT_DIM)

    y = simple_transformer_forward(x, params)
    jax.block_until_ready(y)
    assert y.shape == (SEQ, BATCH, OUTPUT_DIM)
    assert bool(jnp.all((y >= 0.0) & (y <= 1.0)))

    # Reference check (bf16-weight numerics; approx softmax reciprocal -> loose tol).
    y_ref = reference_forward(x, params)
    max_err = float(jnp.max(jnp.abs(y - y_ref)))
    assert max_err < 1e-2, f"kernel/reference mismatch: {max_err}"

    print("KERNEL_OK")
</pallas_src>

<mosaic_0001>
module attributes {stable_mosaic.version = 11 : i64} {
  func.func @transformer_kernel(%arg0: i32, %arg1: memref<16x16xf32, #tpu.memory_space<vmem>>, %arg2: memref<16x16xbf16, #tpu.memory_space<vmem>>, %arg3: memref<1x16xf32, #tpu.memory_space<vmem>>, %arg4: memref<16x16xbf16, #tpu.memory_space<vmem>>, %arg5: memref<1x16xf32, #tpu.memory_space<vmem>>, %arg6: memref<16x16xbf16, #tpu.memory_space<vmem>>, %arg7: memref<1x16xf32, #tpu.memory_space<vmem>>, %arg8: memref<16x16xbf16, #tpu.memory_space<vmem>>, %arg9: memref<1x16xf32, #tpu.memory_space<vmem>>, %arg10: memref<16x2048xbf16, #tpu.memory_space<vmem>>, %arg11: memref<1x2048xf32, #tpu.memory_space<vmem>>, %arg12: memref<16x2048xbf16, #tpu.memory_space<vmem>>, %arg13: memref<1x16xf32, #tpu.memory_space<vmem>>, %arg14: memref<1x16xf32, #tpu.memory_space<vmem>>, %arg15: memref<1x16xf32, #tpu.memory_space<vmem>>, %arg16: memref<1x16xf32, #tpu.memory_space<vmem>>, %arg17: memref<1x16xf32, #tpu.memory_space<vmem>>, %arg18: memref<16x128xbf16, #tpu.memory_space<vmem>>, %arg19: memref<1x128xf32, #tpu.memory_space<vmem>>, %arg20: memref<16x128xf32, #tpu.memory_space<vmem>>) attributes {dimension_semantics = [#tpu.dimension_semantics<arbitrary>], iteration_bounds = array<i64: 1>, scalar_prefetch = 0 : i64, scratch_operands = 0 : i64, tpu.core_type = #tpu.core_type<tc>, window_params = [{pipeline_mode = #tpu.pipeline_mode<synchronous>, transform_indices = @transform_0, window_bounds = array<i64: 16, 16>}, {pipeline_mode = #tpu.pipeline_mode<synchronous>, transform_indices = @transform_1, window_bounds = array<i64: 16, 16>}, {pipeline_mode = #tpu.pipeline_mode<synchronous>, transform_indices = @transform_2, window_bounds = array<i64: 1, 16>}, {pipeline_mode = #tpu.pipeline_mode<synchronous>, transform_indices = @transform_3, window_bounds = array<i64: 16, 16>}, {pipeline_mode = #tpu.pipeline_mode<synchronous>, transform_indices = @transform_4, window_bounds = array<i64: 1, 16>}, {pipeline_mode = #tpu.pipeline_mode<synchronous>, transform_indices = @transform_5, window_bounds = array<i64: 16, 16>}, {pipeline_mode = #tpu.pipeline_mode<synchronous>, transform_indices = @transform_6, window_bounds = array<i64: 1, 16>}, {pipeline_mode = #tpu.pipeline_mode<synchronous>, transform_indices = @transform_7, window_bounds = array<i64: 16, 16>}, {pipeline_mode = #tpu.pipeline_mode<synchronous>, transform_indices = @transform_8, window_bounds = array<i64: 1, 16>}, {pipeline_mode = #tpu.pipeline_mode<synchronous>, transform_indices = @transform_9, window_bounds = array<i64: 16, 2048>}, {pipeline_mode = #tpu.pipeline_mode<synchronous>, transform_indices = @transform_10, window_bounds = array<i64: 1, 2048>}, {pipeline_mode = #tpu.pipeline_mode<synchronous>, transform_indices = @transform_11, window_bounds = array<i64: 16, 2048>}, {pipeline_mode = #tpu.pipeline_mode<synchronous>, transform_indices = @transform_12, window_bounds = array<i64: 1, 16>}, {pipeline_mode = #tpu.pipeline_mode<synchronous>, transform_indices = @transform_13, window_bounds = array<i64: 1, 16>}, {pipeline_mode = #tpu.pipeline_mode<synchronous>, transform_indices = @transform_14, window_bounds = array<i64: 1, 16>}, {pipeline_mode = #tpu.pipeline_mode<synchronous>, transform_indices = @transform_15, window_bounds = array<i64: 1, 16>}, {pipeline_mode = #tpu.pipeline_mode<synchronous>, transform_indices = @transform_16, window_bounds = array<i64: 1, 16>}, {pipeline_mode = #tpu.pipeline_mode<synchronous>, transform_indices = @transform_17, window_bounds = array<i64: 16, 128>}, {pipeline_mode = #tpu.pipeline_mode<synchronous>, transform_indices = @transform_18, window_bounds = array<i64: 1, 128>}, {pipeline_mode = #tpu.pipeline_mode<synchronous>, transform_indices = @transform_19, window_bounds = array<i64: 16, 128>}]} {
    %c0 = arith.constant 0 : index
    %c0_0 = arith.constant 0 : index
    %0 = vector.load %arg1[%c0, %c0_0] : memref<16x16xf32, #tpu.memory_space<vmem>>, vector<16x16xf32>
    %1 = arith.truncf %0 : vector<16x16xf32> to vector<16x16xbf16>
    %c0_1 = arith.constant 0 : index
    %c0_2 = arith.constant 0 : index
    %2 = vector.load %arg2[%c0_1, %c0_2] : memref<16x16xbf16, #tpu.memory_space<vmem>>, vector<16x16xbf16>
    %cst = arith.constant dense<0.000000e+00> : vector<16x16xf32>
    %3 = tpu.matmul %1, %2, %cst {dimension_numbers = #tpu.dot_dimension_numbers<[1], [0], [0], [1], [0, 0, 1, 1], [], []>} : vector<16x16xbf16>, vector<16x16xbf16>, vector<16x16xf32> -> vector<16x16xf32>
    %c0_3 = arith.constant 0 : index
    %c0_4 = arith.constant 0 : index
    %4 = vector.load %arg3[%c0_3, %c0_4] : memref<1x16xf32, #tpu.memory_space<vmem>>, vector<1x16xf32>
    %5 = vector.broadcast %4 : vector<1x16xf32> to vector<16x16xf32>
    %6 = arith.addf %3, %5 : vector<16x16xf32>
    %c0_5 = arith.constant 0 : index
    %c0_6 = arith.constant 0 : index
    %7 = vector.load %arg4[%c0_5, %c0_6] : memref<16x16xbf16, #tpu.memory_space<vmem>>, vector<16x16xbf16>
    %cst_7 = arith.constant dense<0.000000e+00> : vector<16x16xf32>
    %8 = tpu.matmul %1, %7, %cst_7 {dimension_numbers = #tpu.dot_dimension_numbers<[1], [0], [0], [1], [0, 0, 1, 1], [], []>} : vector<16x16xbf16>, vector<16x16xbf16>, vector<16x16xf32> -> vector<16x16xf32>
    %c0_8 = arith.constant 0 : index
    %c0_9 = arith.constant 0 : index
    %9 = vector.load %arg5[%c0_8, %c0_9] : memref<1x16xf32, #tpu.memory_space<vmem>>, vector<1x16xf32>
    %10 = vector.broadcast %9 : vector<1x16xf32> to vector<16x16xf32>
    %11 = arith.addf %8, %10 : vector<16x16xf32>
    %c0_10 = arith.constant 0 : index
    %c0_11 = arith.constant 0 : index
    %12 = vector.load %arg6[%c0_10, %c0_11] : memref<16x16xbf16, #tpu.memory_space<vmem>>, vector<16x16xbf16>
    %cst_12 = arith.constant dense<0.000000e+00> : vector<16x16xf32>
    %13 = tpu.matmul %1, %12, %cst_12 {dimension_numbers = #tpu.dot_dimension_numbers<[1], [0], [0], [1], [0, 0, 1, 1], [], []>} : vector<16x16xbf16>, vector<16x16xbf16>, vector<16x16xf32> -> vector<16x16xf32>
    %c0_13 = arith.constant 0 : index
    %c0_14 = arith.constant 0 : index
    %14 = vector.load %arg7[%c0_13, %c0_14] : memref<1x16xf32, #tpu.memory_space<vmem>>, vector<1x16xf32>
    %15 = vector.broadcast %14 : vector<1x16xf32> to vector<16x16xf32>
    %16 = arith.addf %13, %15 : vector<16x16xf32>
    %17 = arith.truncf %6 : vector<16x16xf32> to vector<16x16xbf16>
    %18 = arith.truncf %11 : vector<16x16xf32> to vector<16x16xbf16>
    %cst_15 = arith.constant dense<0.000000e+00> : vector<16x16xf32>
    %19 = tpu.matmul %17, %18, %cst_15 {dimension_numbers = #tpu.dot_dimension_numbers<[1], [1], [0], [0], [0, 0, 1, 0], [], []>} : vector<16x16xbf16>, vector<16x16xbf16>, vector<16x16xf32> -> vector<16x16xf32>
    %20 = tpu.iota {dimensions = array<i32: 0>} : vector<16x16xi32>
    %c2_i32 = arith.constant 2 : i32
    %c0_i32 = arith.constant 0 : i32
    %21 = arith.cmpi eq, %c2_i32, %c0_i32 : i32
    %c1_i32 = arith.constant 1 : i32
    %22 = arith.select %21, %c1_i32, %c2_i32 : i32
    %23 = vector.broadcast %22 : i32 to vector<16x16xi32>
    %24 = arith.remsi %20, %23 : vector<16x16xi32>
    %c0_i32_16 = arith.constant 0 : i32
    %25 = vector.broadcast %c0_i32_16 : i32 to vector<16x16xi32>
    %26 = arith.cmpi ne, %24, %25 : vector<16x16xi32>
    %c0_i32_17 = arith.constant 0 : i32
    %27 = vector.broadcast %c0_i32_17 : i32 to vector<16x16xi32>
    %28 = arith.cmpi slt, %24, %27 : vector<16x16xi32>
    %c0_i32_18 = arith.constant 0 : i32
    %29 = arith.cmpi slt, %22, %c0_i32_18 : i32
    %30 = vector.broadcast %29 : i1 to vector<16x16xi1>
    %31 = vector.broadcast %30 : vector<16x16xi1> to vector<16x16xi1>
    %32 = arith.xori %28, %31 : vector<16x16xi1>
    %33 = arith.andi %32, %26 : vector<16x16xi1>
    %34 = vector.broadcast %22 : i32 to vector<16x16xi32>
    %35 = arith.addi %24, %34 : vector<16x16xi32>
    %36 = arith.select %33, %35, %24 : vector<16x16xi1>, vector<16x16xi32>
    %37 = tpu.iota {dimensions = array<i32: 1>} : vector<16x16xi32>
    %c2_i32_19 = arith.constant 2 : i32
    %c0_i32_20 = arith.constant 0 : i32
    %38 = arith.cmpi eq, %c2_i32_19, %c0_i32_20 : i32
    %c1_i32_21 = arith.constant 1 : i32
    %39 = arith.select %38, %c1_i32_21, %c2_i32_19 : i32
    %40 = vector.broadcast %39 : i32 to vector<16x16xi32>
    %41 = arith.remsi %37, %40 : vector<16x16xi32>
    %c0_i32_22 = arith.constant 0 : i32
    %42 = vector.broadcast %c0_i32_22 : i32 to vector<16x16xi32>
    %43 = arith.cmpi ne, %41, %42 : vector<16x16xi32>
    %c0_i32_23 = arith.constant 0 : i32
    %44 = vector.broadcast %c0_i32_23 : i32 to vector<16x16xi32>
    %45 = arith.cmpi slt, %41, %44 : vector<16x16xi32>
    %c0_i32_24 = arith.constant 0 : i32
    %46 = arith.cmpi slt, %39, %c0_i32_24 : i32
    %47 = vector.broadcast %46 : i1 to vector<16x16xi1>
    %48 = vector.broadcast %47 : vector<16x16xi1> to vector<16x16xi1>
    %49 = arith.xori %45, %48 : vector<16x16xi1>
    %50 = arith.andi %49, %43 : vector<16x16xi1>
    %51 = vector.broadcast %39 : i32 to vector<16x16xi32>
    %52 = arith.addi %41, %51 : vector<16x16xi32>
    %53 = arith.select %50, %52, %41 : vector<16x16xi1>, vector<16x16xi32>
    %54 = arith.cmpi eq, %36, %53 : vector<16x16xi32>
    %cst_25 = arith.constant -1.000000e+30 : f32
    %55 = vector.broadcast %cst_25 : f32 to vector<16x16xf32>
    %56 = arith.select %54, %19, %55 : vector<16x16xi1>, vector<16x16xf32>
    %cst_26 = arith.constant dense<0xFF800000> : vector<16xf32>
    %57 = vector.multi_reduction <maximumf>, %56, %cst_26 [1] : vector<16x16xf32> to vector<16xf32>
    %58 = vector.shape_cast %57 : vector<16xf32> to vector<16x1xf32>
    %59 = vector.broadcast %58 : vector<16x1xf32> to vector<16x16xf32>
    %60 = arith.subf %56, %59 : vector<16x16xf32>
    %61 = math.exp %60 : vector<16x16xf32>
    %cst_27 = arith.constant dense<0.000000e+00> : vector<16xf32>
    %62 = vector.multi_reduction <add>, %61, %cst_27 [1] : vector<16x16xf32> to vector<16xf32>
    %63 = vector.shape_cast %62 : vector<16xf32> to vector<16x1xf32>
    %64 = tpu.reciprocal %63 {approx = true} : vector<16x1xf32> -> vector<16x1xf32>
    %65 = vector.broadcast %64 : vector<16x1xf32> to vector<16x16xf32>
    %66 = arith.mulf %61, %65 : vector<16x16xf32>
    %67 = arith.truncf %66 : vector<16x16xf32> to vector<16x16xbf16>
    %68 = arith.truncf %16 : vector<16x16xf32> to vector<16x16xbf16>
    %cst_28 = arith.constant dense<0.000000e+00> : vector<16x16xf32>
    %69 = tpu.matmul %67, %68, %cst_28 {dimension_numbers = #tpu.dot_dimension_numbers<[1], [0], [0], [1], [0, 0, 1, 1], [], []>} : vector<16x16xbf16>, vector<16x16xbf16>, vector<16x16xf32> -> vector<16x16xf32>
    %70 = arith.truncf %69 : vector<16x16xf32> to vector<16x16xbf16>
    %c0_29 = arith.constant 0 : index
    %c0_30 = arith.constant 0 : index
    %71 = vector.load %arg8[%c0_29, %c0_30] : memref<16x16xbf16, #tpu.memory_space<vmem>>, vector<16x16xbf16>
    %cst_31 = arith.constant dense<0.000000e+00> : vector<16x16xf32>
    %72 = tpu.matmul %70, %71, %cst_31 {dimension_numbers = #tpu.dot_dimension_numbers<[1], [0], [0], [1], [0, 0, 1, 1], [], []>} : vector<16x16xbf16>, vector<16x16xbf16>, vector<16x16xf32> -> vector<16x16xf32>
    %c0_32 = arith.constant 0 : index
    %c0_33 = arith.constant 0 : index
    %73 = vector.load %arg9[%c0_32, %c0_33] : memref<1x16xf32, #tpu.memory_space<vmem>>, vector<1x16xf32>
    %74 = vector.broadcast %73 : vector<1x16xf32> to vector<16x16xf32>
    %75 = arith.addf %72, %74 : vector<16x16xf32>
    %76 = arith.addf %0, %75 : vector<16x16xf32>
    %c0_34 = arith.constant 0 : index
    %c0_35 = arith.constant 0 : index
    %77 = vector.load %arg14[%c0_34, %c0_35] : memref<1x16xf32, #tpu.memory_space<vmem>>, vector<1x16xf32>
    %c0_36 = arith.constant 0 : index
    %c0_37 = arith.constant 0 : index
    %78 = vector.load %arg15[%c0_36, %c0_37] : memref<1x16xf32, #tpu.memory_space<vmem>>, vector<1x16xf32>
    %cst_38 = arith.constant dense<0.000000e+00> : vector<16xf32>
    %79 = vector.multi_reduction <add>, %76, %cst_38 [1] : vector<16x16xf32> to vector<16xf32>
    %80 = vector.shape_cast %79 : vector<16xf32> to vector<16x1xf32>
    %cst_39 = arith.constant 1.600000e+01 : f32
    %81 = vector.broadcast %cst_39 : f32 to vector<16x1xf32>
    %82 = arith.divf %80, %81 : vector<16x1xf32>
    %83 = vector.broadcast %82 : vector<16x1xf32> to vector<16x16xf32>
    %84 = arith.subf %76, %83 : vector<16x16xf32>
    %85 = arith.mulf %84, %84 : vector<16x16xf32>
    %cst_40 = arith.constant dense<0.000000e+00> : vector<16xf32>
    %86 = vector.multi_reduction <add>, %85, %cst_40 [1] : vector<16x16xf32> to vector<16xf32>
    %87 = vector.shape_cast %86 : vector<16xf32> to vector<16x1xf32>
    %cst_41 = arith.constant 1.600000e+01 : f32
    %88 = vector.broadcast %cst_41 : f32 to vector<16x1xf32>
    %89 = arith.divf %87, %88 : vector<16x1xf32>
    %cst_42 = arith.constant 9.99999974E-6 : f32
    %90 = vector.broadcast %cst_42 : f32 to vector<16x1xf32>
    %91 = arith.addf %89, %90 : vector<16x1xf32>
    %92 = math.rsqrt %91 : vector<16x1xf32>
    %93 = vector.broadcast %92 : vector<16x1xf32> to vector<16x16xf32>
    %94 = arith.mulf %84, %93 : vector<16x16xf32>
    %95 = vector.broadcast %77 : vector<1x16xf32> to vector<16x16xf32>
    %96 = arith.mulf %94, %95 : vector<16x16xf32>
    %97 = vector.broadcast %78 : vector<1x16xf32> to vector<16x16xf32>
    %98 = arith.addf %96, %97 : vector<16x16xf32>
    %99 = arith.truncf %98 : vector<16x16xf32> to vector<16x16xbf16>
    %cst_43 = arith.constant 0.000000e+00 : f32
    %100 = vector.broadcast %cst_43 : f32 to vector<16x16xf32>
    %c0_44 = arith.constant 0 : index
    %c0_45 = arith.constant 0 : index
    %101 = vector.load %arg10[%c0_44, %c0_45] : memref<16x2048xbf16, #tpu.memory_space<vmem>>, vector<16x512xbf16>
    %cst_46 = arith.constant dense<0.000000e+00> : vector<16x512xf32>
    %102 = tpu.matmul %99, %101, %cst_46 {dimension_numbers = #tpu.dot_dimension_numbers<[1], [0], [0], [1], [0, 0, 1, 1], [], []>} : vector<16x16xbf16>, vector<16x512xbf16>, vector<16x512xf32> -> vector<16x512xf32>
    %c0_47 = arith.constant 0 : index
    %c0_48 = arith.constant 0 : index
    %103 = vector.load %arg11[%c0_47, %c0_48] : memref<1x2048xf32, #tpu.memory_space<vmem>>, vector<1x512xf32>
    %104 = vector.broadcast %103 : vector<1x512xf32> to vector<16x512xf32>
    %105 = arith.addf %102, %104 : vector<16x512xf32>
    %cst_49 = arith.constant 0.000000e+00 : f32
    %106 = vector.broadcast %cst_49 : f32 to vector<16x512xf32>
    %107 = arith.maximumf %105, %106 : vector<16x512xf32>
    %108 = arith.truncf %107 : vector<16x512xf32> to vector<16x512xbf16>
    %c0_50 = arith.constant 0 : index
    %c0_51 = arith.constant 0 : index
    %109 = vector.load %arg12[%c0_50, %c0_51] : memref<16x2048xbf16, #tpu.memory_space<vmem>>, vector<16x512xbf16>
    %cst_52 = arith.constant dense<0.000000e+00> : vector<16x16xf32>
    %110 = tpu.matmul %108, %109, %cst_52 {dimension_numbers = #tpu.dot_dimension_numbers<[1], [1], [0], [0], [0, 0, 1, 0], [], []>} : vector<16x512xbf16>, vector<16x512xbf16>, vector<16x16xf32> -> vector<16x16xf32>
    %111 = arith.addf %100, %110 : vector<16x16xf32>
    %c0_53 = arith.constant 0 : index
    %c512 = arith.constant 512 : index
    %112 = vector.load %arg10[%c0_53, %c512] : memref<16x2048xbf16, #tpu.memory_space<vmem>>, vector<16x512xbf16>
    %cst_54 = arith.constant dense<0.000000e+00> : vector<16x512xf32>
    %113 = tpu.matmul %99, %112, %cst_54 {dimension_numbers = #tpu.dot_dimension_numbers<[1], [0], [0], [1], [0, 0, 1, 1], [], []>} : vector<16x16xbf16>, vector<16x512xbf16>, vector<16x512xf32> -> vector<16x512xf32>
    %c0_55 = arith.constant 0 : index
    %c512_56 = arith.constant 512 : index
    %114 = vector.load %arg11[%c0_55, %c512_56] : memref<1x2048xf32, #tpu.memory_space<vmem>>, vector<1x512xf32>
    %115 = vector.broadcast %114 : vector<1x512xf32> to vector<16x512xf32>
    %116 = arith.addf %113, %115 : vector<16x512xf32>
    %cst_57 = arith.constant 0.000000e+00 : f32
    %117 = vector.broadcast %cst_57 : f32 to vector<16x512xf32>
    %118 = arith.maximumf %116, %117 : vector<16x512xf32>
    %119 = arith.truncf %118 : vector<16x512xf32> to vector<16x512xbf16>
    %c0_58 = arith.constant 0 : index
    %c512_59 = arith.constant 512 : index
    %120 = vector.load %arg12[%c0_58, %c512_59] : memref<16x2048xbf16, #tpu.memory_space<vmem>>, vector<16x512xbf16>
    %cst_60 = arith.constant dense<0.000000e+00> : vector<16x16xf32>
    %121 = tpu.matmul %119, %120, %cst_60 {dimension_numbers = #tpu.dot_dimension_numbers<[1], [1], [0], [0], [0, 0, 1, 0], [], []>} : vector<16x512xbf16>, vector<16x512xbf16>, vector<16x16xf32> -> vector<16x16xf32>
    %122 = arith.addf %111, %121 : vector<16x16xf32>
    %c0_61 = arith.constant 0 : index
    %c1024 = arith.constant 1024 : index
    %123 = vector.load %arg10[%c0_61, %c1024] : memref<16x2048xbf16, #tpu.memory_space<vmem>>, vector<16x512xbf16>
    %cst_62 = arith.constant dense<0.000000e+00> : vector<16x512xf32>
    %124 = tpu.matmul %99, %123, %cst_62 {dimension_numbers = #tpu.dot_dimension_numbers<[1], [0], [0], [1], [0, 0, 1, 1], [], []>} : vector<16x16xbf16>, vector<16x512xbf16>, vector<16x512xf32> -> vector<16x512xf32>
    %c0_63 = arith.constant 0 : index
    %c1024_64 = arith.constant 1024 : index
    %125 = vector.load %arg11[%c0_63, %c1024_64] : memref<1x2048xf32, #tpu.memory_space<vmem>>, vector<1x512xf32>
    %126 = vector.broadcast %125 : vector<1x512xf32> to vector<16x512xf32>
    %127 = arith.addf %124, %126 : vector<16x512xf32>
    %cst_65 = arith.constant 0.000000e+00 : f32
    %128 = vector.broadcast %cst_65 : f32 to vector<16x512xf32>
    %129 = arith.maximumf %127, %128 : vector<16x512xf32>
    %130 = arith.truncf %129 : vector<16x512xf32> to vector<16x512xbf16>
    %c0_66 = arith.constant 0 : index
    %c1024_67 = arith.constant 1024 : index
    %131 = vector.load %arg12[%c0_66, %c1024_67] : memref<16x2048xbf16, #tpu.memory_space<vmem>>, vector<16x512xbf16>
    %cst_68 = arith.constant dense<0.000000e+00> : vector<16x16xf32>
    %132 = tpu.matmul %130, %131, %cst_68 {dimension_numbers = #tpu.dot_dimension_numbers<[1], [1], [0], [0], [0, 0, 1, 0], [], []>} : vector<16x512xbf16>, vector<16x512xbf16>, vector<16x16xf32> -> vector<16x16xf32>
    %133 = arith.addf %122, %132 : vector<16x16xf32>
    %c0_69 = arith.constant 0 : index
    %c1536 = arith.constant 1536 : index
    %134 = vector.load %arg10[%c0_69, %c1536] : memref<16x2048xbf16, #tpu.memory_space<vmem>>, vector<16x512xbf16>
    %cst_70 = arith.constant dense<0.000000e+00> : vector<16x512xf32>
    %135 = tpu.matmul %99, %134, %cst_70 {dimension_numbers = #tpu.dot_dimension_numbers<[1], [0], [0], [1], [0, 0, 1, 1], [], []>} : vector<16x16xbf16>, vector<16x512xbf16>, vector<16x512xf32> -> vector<16x512xf32>
    %c0_71 = arith.constant 0 : index
    %c1536_72 = arith.constant 1536 : index
    %136 = vector.load %arg11[%c0_71, %c1536_72] : memref<1x2048xf32, #tpu.memory_space<vmem>>, vector<1x512xf32>
    %137 = vector.broadcast %136 : vector<1x512xf32> to vector<16x512xf32>
    %138 = arith.addf %135, %137 : vector<16x512xf32>
    %cst_73 = arith.constant 0.000000e+00 : f32
    %139 = vector.broadcast %cst_73 : f32 to vector<16x512xf32>
    %140 = arith.maximumf %138, %139 : vector<16x512xf32>
    %141 = arith.truncf %140 : vector<16x512xf32> to vector<16x512xbf16>
    %c0_74 = arith.constant 0 : index
    %c1536_75 = arith.constant 1536 : index
    %142 = vector.load %arg12[%c0_74, %c1536_75] : memref<16x2048xbf16, #tpu.memory_space<vmem>>, vector<16x512xbf16>
    %cst_76 = arith.constant dense<0.000000e+00> : vector<16x16xf32>
    %143 = tpu.matmul %141, %142, %cst_76 {dimension_numbers = #tpu.dot_dimension_numbers<[1], [1], [0], [0], [0, 0, 1, 0], [], []>} : vector<16x512xbf16>, vector<16x512xbf16>, vector<16x16xf32> -> vector<16x16xf32>
    %144 = arith.addf %133, %143 : vector<16x16xf32>
    %c0_77 = arith.constant 0 : index
    %c0_78 = arith.constant 0 : index
    %145 = vector.load %arg13[%c0_77, %c0_78] : memref<1x16xf32, #tpu.memory_space<vmem>>, vector<1x16xf32>
    %146 = vector.broadcast %145 : vector<1x16xf32> to vector<16x16xf32>
    %147 = arith.addf %144, %146 : vector<16x16xf32>
    %148 = arith.addf %98, %147 : vector<16x16xf32>
    %c0_79 = arith.constant 0 : index
    %c0_80 = arith.constant 0 : index
    %149 = vector.load %arg16[%c0_79, %c0_80] : memref<1x16xf32, #tpu.memory_space<vmem>>, vector<1x16xf32>
    %c0_81 = arith.constant 0 : index
    %c0_82 = arith.constant 0 : index
    %150 = vector.load %arg17[%c0_81, %c0_82] : memref<1x16xf32, #tpu.memory_space<vmem>>, vector<1x16xf32>
    %cst_83 = arith.constant dense<0.000000e+00> : vector<16xf32>
    %151 = vector.multi_reduction <add>, %148, %cst_83 [1] : vector<16x16xf32> to vector<16xf32>
    %152 = vector.shape_cast %151 : vector<16xf32> to vector<16x1xf32>
    %cst_84 = arith.constant 1.600000e+01 : f32
    %153 = vector.broadcast %cst_84 : f32 to vector<16x1xf32>
    %154 = arith.divf %152, %153 : vector<16x1xf32>
    %155 = vector.broadcast %154 : vector<16x1xf32> to vector<16x16xf32>
    %156 = arith.subf %148, %155 : vector<16x16xf32>
    %157 = arith.mulf %156, %156 : vector<16x16xf32>
    %cst_85 = arith.constant dense<0.000000e+00> : vector<16xf32>
    %158 = vector.multi_reduction <add>, %157, %cst_85 [1] : vector<16x16xf32> to vector<16xf32>
    %159 = vector.shape_cast %158 : vector<16xf32> to vector<16x1xf32>
    %cst_86 = arith.constant 1.600000e+01 : f32
    %160 = vector.broadcast %cst_86 : f32 to vector<16x1xf32>
    %161 = arith.divf %159, %160 : vector<16x1xf32>
    %cst_87 = arith.constant 9.99999974E-6 : f32
    %162 = vector.broadcast %cst_87 : f32 to vector<16x1xf32>
    %163 = arith.addf %161, %162 : vector<16x1xf32>
    %164 = math.rsqrt %163 : vector<16x1xf32>
    %165 = vector.broadcast %164 : vector<16x1xf32> to vector<16x16xf32>
    %166 = arith.mulf %156, %165 : vector<16x16xf32>
    %167 = vector.broadcast %149 : vector<1x16xf32> to vector<16x16xf32>
    %168 = arith.mulf %166, %167 : vector<16x16xf32>
    %169 = vector.broadcast %150 : vector<1x16xf32> to vector<16x16xf32>
    %170 = arith.addf %168, %169 : vector<16x16xf32>
    %171 = arith.truncf %170 : vector<16x16xf32> to vector<16x16xbf16>
    %c0_88 = arith.constant 0 : index
    %c0_89 = arith.constant 0 : index
    %172 = vector.load %arg18[%c0_88, %c0_89] : memref<16x128xbf16, #tpu.memory_space<vmem>>, vector<16x128xbf16>
    %cst_90 = arith.constant dense<0.000000e+00> : vector<16x128xf32>
    %173 = tpu.matmul %171, %172, %cst_90 {dimension_numbers = #tpu.dot_dimension_numbers<[1], [0], [0], [1], [0, 0, 1, 1], [], []>} : vector<16x16xbf16>, vector<16x128xbf16>, vector<16x128xf32> -> vector<16x128xf32>
    %c0_91 = arith.constant 0 : index
    %c0_92 = arith.constant 0 : index
    %174 = vector.load %arg19[%c0_91, %c0_92] : memref<1x128xf32, #tpu.memory_space<vmem>>, vector<1x128xf32>
    %175 = vector.broadcast %174 : vector<1x128xf32> to vector<16x128xf32>
    %176 = arith.addf %173, %175 : vector<16x128xf32>
    %177 = arith.negf %176 : vector<16x128xf32>
    %178 = math.exp %177 : vector<16x128xf32>
    %cst_93 = arith.constant 1.000000e+00 : f32
    %179 = vector.broadcast %cst_93 : f32 to vector<16x128xf32>
    %180 = arith.addf %179, %178 : vector<16x128xf32>
    %181 = arith.divf %179, %180 : vector<16x128xf32>
    %c0_94 = arith.constant 0 : index
    %c0_95 = arith.constant 0 : index
    %182 = vector.load %arg20[%c0_94, %c0_95] : memref<16x128xf32, #tpu.memory_space<vmem>>, vector<16x128xf32>
    tpu.vector_store %arg20[%c0_94, %c0_95], %181 {strides = array<i32>} : memref<16x128xf32, #tpu.memory_space<vmem>>, vector<16x128xf32>,
    return
  }
  func.func @transform_0(%arg0: i32) -> (i32, i32) {
    %c0_i32 = arith.constant 0 : i32
    %c0_i32_0 = arith.constant 0 : i32
    %c0_i32_1 = arith.constant 0 : i32
    return %c0_i32, %c0_i32_0 : i32, i32
  }
  func.func @transform_1(%arg0: i32) -> (i32, i32) {
    %c0_i32 = arith.constant 0 : i32
    %c0_i32_0 = arith.constant 0 : i32
    %c0_i32_1 = arith.constant 0 : i32
    return %c0_i32, %c0_i32_0 : i32, i32
  }
  func.func @transform_2(%arg0: i32) -> (i32, i32) {
    %c0_i32 = arith.constant 0 : i32
    %c0_i32_0 = arith.constant 0 : i32
    %c0_i32_1 = arith.constant 0 : i32
    return %c0_i32, %c0_i32_0 : i32, i32
  }
  func.func @transform_3(%arg0: i32) -> (i32, i32) {
    %c0_i32 = arith.constant 0 : i32
    %c0_i32_0 = arith.constant 0 : i32
    %c0_i32_1 = arith.constant 0 : i32
    return %c0_i32, %c0_i32_0 : i32, i32
  }
  func.func @transform_4(%arg0: i32) -> (i32, i32) {
    %c0_i32 = arith.constant 0 : i32
    %c0_i32_0 = arith.constant 0 : i32
    %c0_i32_1 = arith.constant 0 : i32
    return %c0_i32, %c0_i32_0 : i32, i32
  }
  func.func @transform_5(%arg0: i32) -> (i32, i32) {
    %c0_i32 = arith.constant 0 : i32
    %c0_i32_0 = arith.constant 0 : i32
    %c0_i32_1 = arith.constant 0 : i32
    return %c0_i32, %c0_i32_0 : i32, i32
  }
  func.func @transform_6(%arg0: i32) -> (i32, i32) {
    %c0_i32 = arith.constant 0 : i32
    %c0_i32_0 = arith.constant 0 : i32
    %c0_i32_1 = arith.constant 0 : i32
    return %c0_i32, %c0_i32_0 : i32, i32
  }
  func.func @transform_7(%arg0: i32) -> (i32, i32) {
    %c0_i32 = arith.constant 0 : i32
    %c0_i32_0 = arith.constant 0 : i32
    %c0_i32_1 = arith.constant 0 : i32
    return %c0_i32, %c0_i32_0 : i32, i32
  }
  func.func @transform_8(%arg0: i32) -> (i32, i32) {
    %c0_i32 = arith.constant 0 : i32
    %c0_i32_0 = arith.constant 0 : i32
    %c0_i32_1 = arith.constant 0 : i32
    return %c0_i32, %c0_i32_0 : i32, i32
  }
  func.func @transform_9(%arg0: i32) -> (i32, i32) {
    %c0_i32 = arith.constant 0 : i32
    %c0_i32_0 = arith.constant 0 : i32
    %c0_i32_1 = arith.constant 0 : i32
    return %c0_i32, %c0_i32_0 : i32, i32
  }
  func.func @transform_10(%arg0: i32) -> (i32, i32) {
    %c0_i32 = arith.constant 0 : i32
    %c0_i32_0 = arith.constant 0 : i32
    %c0_i32_1 = arith.constant 0 : i32
    return %c0_i32, %c0_i32_0 : i32, i32
  }
  func.func @transform_11(%arg0: i32) -> (i32, i32) {
    %c0_i32 = arith.constant 0 : i32
    %c0_i32_0 = arith.constant 0 : i32
    %c0_i32_1 = arith.constant 0 : i32
    return %c0_i32, %c0_i32_0 : i32, i32
  }
  func.func @transform_12(%arg0: i32) -> (i32, i32) {
    %c0_i32 = arith.constant 0 : i32
    %c0_i32_0 = arith.constant 0 : i32
    %c0_i32_1 = arith.constant 0 : i32
    return %c0_i32, %c0_i32_0 : i32, i32
  }
  func.func @transform_13(%arg0: i32) -> (i32, i32) {
    %c0_i32 = arith.constant 0 : i32
    %c0_i32_0 = arith.constant 0 : i32
    %c0_i32_1 = arith.constant 0 : i32
    return %c0_i32, %c0_i32_0 : i32, i32
  }
  func.func @transform_14(%arg0: i32) -> (i32, i32) {
    %c0_i32 = arith.constant 0 : i32
    %c0_i32_0 = arith.constant 0 : i32
    %c0_i32_1 = arith.constant 0 : i32
    return %c0_i32, %c0_i32_0 : i32, i32
  }
  func.func @transform_15(%arg0: i32) -> (i32, i32) {
    %c0_i32 = arith.constant 0 : i32
    %c0_i32_0 = arith.constant 0 : i32
    %c0_i32_1 = arith.constant 0 : i32
    return %c0_i32, %c0_i32_0 : i32, i32
  }
  func.func @transform_16(%arg0: i32) -> (i32, i32) {
    %c0_i32 = arith.constant 0 : i32
    %c0_i32_0 = arith.constant 0 : i32
    %c0_i32_1 = arith.constant 0 : i32
    return %c0_i32, %c0_i32_0 : i32, i32
  }
  func.func @transform_17(%arg0: i32) -> (i32, i32) {
    %c0_i32 = arith.constant 0 : i32
    %c0_i32_0 = arith.constant 0 : i32
    %c0_i32_1 = arith.constant 0 : i32
    return %c0_i32, %c0_i32_0 : i32, i32
  }
  func.func @transform_18(%arg0: i32) -> (i32, i32) {
    %c0_i32 = arith.constant 0 : i32
    %c0_i32_0 = arith.constant 0 : i32
    %c0_i32_1 = arith.constant 0 : i32
    return %c0_i32, %c0_i32_0 : i32, i32
  }
  func.func @transform_19(%arg0: i32) -> (i32, i32) {
    %c0_i32 = arith.constant 0 : i32
    %c0_i32_0 = arith.constant 0 : i32
    %c0_i32_1 = arith.constant 0 : i32
    return %c0_i32, %c0_i32_0 : i32, i32
  }
}

</mosaic_0001>

<llo_original>
// kernel: tpu_custom_call.1
$region0: #{tpu_custom_call.1}
  #allocation0 [shape = 'u32[]', space=smem, size = 0x4, offset = 0x4, fixed_abs, tag = 'smem constant byte address 0x4 - core index']
  #allocation1 [shape = 'u32[144,128]{1,0:T(1,128)}', space=vmem, size = 0x12000, scoped, tag = 'internal scratch']
  %s0 = inlined_call_operand.hbm [shape: f32[16,16], index: 0, kind: input, shape index: {}]
  %s1 = inlined_call_operand.hbm [shape: bf16[16,16], index: 1, kind: input, shape index: {}]
  %s2 = inlined_call_operand.vmem [shape: f32[1,16], index: 2, kind: input, shape index: {}]
  %s3 = inlined_call_operand.hbm [shape: bf16[16,16], index: 3, kind: input, shape index: {}]
  %s4 = inlined_call_operand.hbm [shape: f32[1,16], index: 4, kind: input, shape index: {}]
  %s5 = inlined_call_operand.hbm [shape: bf16[16,16], index: 5, kind: input, shape index: {}]
  %s6 = inlined_call_operand.hbm [shape: f32[1,16], index: 6, kind: input, shape index: {}]
  %s7 = inlined_call_operand.hbm [shape: bf16[16,16], index: 7, kind: input, shape index: {}]
  %s8 = inlined_call_operand.hbm [shape: f32[1,16], index: 8, kind: input, shape index: {}]
  %s9 = inlined_call_operand.hbm [shape: bf16[16,2048], index: 9, kind: input, shape index: {}]
  %s10 = inlined_call_operand.vmem [shape: f32[1,2048], index: 10, kind: input, shape index: {}]
  %s11 = inlined_call_operand.hbm [shape: bf16[16,2048], index: 11, kind: input, shape index: {}]
  %s12 = inlined_call_operand.hbm [shape: f32[1,16], index: 12, kind: input, shape index: {}]
  %s13 = inlined_call_operand.hbm [shape: f32[1,16], index: 13, kind: input, shape index: {}]
  %s14 = inlined_call_operand.hbm [shape: f32[1,16], index: 14, kind: input, shape index: {}]
  %s15 = inlined_call_operand.vmem [shape: f32[1,16], index: 15, kind: input, shape index: {}]
  %s16 = inlined_call_operand.vmem [shape: f32[1,16], index: 16, kind: input, shape index: {}]
  %s17 = inlined_call_operand.vmem [shape: bf16[16,128], index: 17, kind: input, shape index: {}]
  %s18 = inlined_call_operand.vmem [shape: f32[1,128], index: 18, kind: input, shape index: {}]
  %s19 = inlined_call_operand.hbm [shape: f32[16,128], index: 19, kind: output, shape index: {}]
  %s20 = sld [smem:[#allocation0]]
  $region138: #{tpu_custom_call.1} parent=0
    _
  %s22 = ssub.s32 1, %s20
  %s23 = scalar_select 0, %s22, %s20
  $region1: #{tpu_custom_call.1} parent=0
    #allocation2 [shape = 'u8[8192]{0}', space=vmem, size = 0x2000, scoped, tag = 'input window, operand 0, single buffered']
    #allocation3 [shape = 's32[1]{0}', space=sflag, size = 0x4, scoped, tag = 'scoped memory for tpu_custom_call.1']
    #allocation4 [shape = 's32[1]{0}', space=sflag, size = 0x4, scoped, tag = 'scoped memory for tpu_custom_call.1']
    #allocation5 [shape = 'u8[4096]{0}', space=vmem, size = 0x1000, scoped, tag = 'input window, operand 1, single buffered']
    #allocation6 [shape = 's32[1]{0}', space=sflag, size = 0x4, scoped, tag = 'scoped memory for tpu_custom_call.1']
    #allocation7 [shape = 'u8[4096]{0}', space=vmem, size = 0x1000, scoped, tag = 'input window, operand 3, single buffered']
    #allocation8 [shape = 'u8[512]{0}', space=vmem, size = 0x400, scoped, tag = 'input window, operand 4, single buffered']
    #allocation9 [shape = 's32[1]{0}', space=sflag, size = 0x4, scoped, tag = 'scoped memory for tpu_custom_call.1']
    #allocation10 [shape = 'u8[4096]{0}', space=vmem, size = 0x1000, scoped, tag = 'input window, operand 5, single buffered']
    #allocation11 [shape = 'u8[512]{0}', space=vmem, size = 0x400, scoped, tag = 'input window, operand 6, single buffered']
    #allocation12 [shape = 's32[1]{0}', space=sflag, size = 0x4, scoped, tag = 'scoped memory for tpu_custom_call.1']
    #allocation13 [shape = 'u8[4096]{0}', space=vmem, size = 0x1000, scoped, tag = 'input window, operand 7, single buffered']
    #allocation14 [shape = 'u8[512]{0}', space=vmem, size = 0x400, scoped, tag = 'input window, operand 8, single buffered']
    #allocation15 [shape = 's32[1]{0}', space=sflag, size = 0x4, scoped, tag = 'scoped memory for tpu_custom_call.1']
    #allocation16 [shape = 'u8[65536]{0}', space=vmem, size = 0x10000, scoped, tag = 'input window, operand 9, single buffered']
    #allocation17 [shape = 'u8[65536]{0}', space=vmem, size = 0x10000, scoped, tag = 'input window, operand 11, single buffered']
    #allocation18 [shape = 's32[1]{0}', space=sflag, size = 0x4, scoped, tag = 'scoped memory for tpu_custom_call.1']
    #allocation19 [shape = 'u8[512]{0}', space=vmem, size = 0x400, scoped, tag = 'input window, operand 12, single buffered']
    #allocation20 [shape = 'u8[512]{0}', space=vmem, size = 0x400, scoped, tag = 'input window, operand 13, single buffered']
    #allocation21 [shape = 's32[1]{0}', space=sflag, size = 0x4, scoped, tag = 'scoped memory for tpu_custom_call.1']
    #allocation22 [shape = 'u8[512]{0}', space=vmem, size = 0x400, scoped, tag = 'input window, operand 14, single buffered']
    #allocation23 [shape = 'u8[8192]{0}', space=vmem, size = 0x2000, scoped, tag = 'output window, operand 0, single buffered']
    %24 = vsyncpa [#allocation3], 0
    %25 = vsyncpa [#allocation6], 0
    %26 = vsyncpa [#allocation9], 0
    %27 = vsyncpa [#allocation12], 0
    %28 = vsyncpa [#allocation15], 0
    %29 = vsyncpa [#allocation18], 0
    %30 = vsyncpa [#allocation21], 0
    %31 = vsyncpa [#allocation4], 0
    // Predicated region
    $region2: #{tpu_custom_call.1} parent=1 // pred_check
      _
    $region3: #{tpu_custom_call.1} parent=1 // pred_check_branch
      %33 = sbr.rel (0) target = $region5
    $region4: #{tpu_custom_call.1} parent=1 // pred_region
      %s35 = ssub.s32 256, 256
      %36 = vsyncadd [#allocation3], %s35
      %s37 = sshll.u32 [#allocation2], 4
      %s38 = int_to_ptr.vmem [resolvable:$true] %s37
      %43 = dma.hbm_to_vmem [thread:$0]  %s0, 256, %s38, [#allocation3], 128, 128, 8
    $region5: #{tpu_custom_call.1} parent=1 // pred_fallthru
      _
    // Predicated region
    $region6: #{tpu_custom_call.1} parent=1 // pred_check
      _
    $region7: #{tpu_custom_call.1} parent=1 // pred_check_branch
      %45 = sbr.rel (0) target = $region9
    $region8: #{tpu_custom_call.1} parent=1 // pred_region
      %s47 = ssub.s32 128, 128
      %48 = vsyncadd [#allocation6], %s47
      %s49 = sshll.u32 [#allocation5], 4
      %s50 = int_to_ptr.vmem [resolvable:$true] %s49
      %55 = dma.hbm_to_vmem [thread:$0]  %s1, 128, %s50, [#allocation6], 64, 64, 4
    $region9: #{tpu_custom_call.1} parent=1 // pred_fallthru
      _
    // Predicated region
    $region10: #{tpu_custom_call.1} parent=1 // pred_check
      _
    $region11: #{tpu_custom_call.1} parent=1 // pred_check_branch
      %57 = sbr.rel (0) target = $region13
    $region12: #{tpu_custom_call.1} parent=1 // pred_region
      _
    $region13: #{tpu_custom_call.1} parent=1 // pred_fallthru
      _
    // Predicated region
    $region14: #{tpu_custom_call.1} parent=1 // pred_check
      _
    $region15: #{tpu_custom_call.1} parent=1 // pred_check_branch
      %59 = sbr.rel (0) target = $region17
    $region16: #{tpu_custom_call.1} parent=1 // pred_region
      %s61 = ssub.s32 128, 128
      %62 = vsyncadd [#allocation6], %s61
      %s63 = sshll.u32 [#allocation7], 4
      %s64 = int_to_ptr.vmem [resolvable:$true] %s63
      %69 = dma.hbm_to_vmem [thread:$0]  %s3, 128, %s64, [#allocation6], 64, 64, 4
    $region17: #{tpu_custom_call.1} parent=1 // pred_fallthru
      _
    // Predicated region
    $region18: #{tpu_custom_call.1} parent=1 // pred_check
      _
    $region19: #{tpu_custom_call.1} parent=1 // pred_check_branch
      %71 = sbr.rel (0) target = $region21
    $region20: #{tpu_custom_call.1} parent=1 // pred_region
      %s73 = ssub.s32 16, 16
      %74 = vsyncadd [#allocation9], %s73
      %s76 = sshll.u32 [#allocation8], 4
      %s77 = int_to_ptr.vmem [resolvable:$true] %s76
      %79 = dma.hbm_to_vmem [thread:$0]  %s4, 16, %s77, [#allocation9]
    $region21: #{tpu_custom_call.1} parent=1 // pred_fallthru
      _
    // Predicated region
    $region22: #{tpu_custom_call.1} parent=1 // pred_check
      _
    $region23: #{tpu_custom_call.1} parent=1 // pred_check_branch
      %81 = sbr.rel (0) target = $region25
    $region24: #{tpu_custom_call.1} parent=1 // pred_region
      %s83 = ssub.s32 128, 128
      %84 = vsyncadd [#allocation9], %s83
      %s85 = sshll.u32 [#allocation10], 4
      %s86 = int_to_ptr.vmem [resolvable:$true] %s85
      %91 = dma.hbm_to_vmem [thread:$0]  %s5, 128, %s86, [#allocation9], 64, 64, 4
    $region25: #{tpu_custom_call.1} parent=1 // pred_fallthru
      _
    // Predicated region
    $region26: #{tpu_custom_call.1} parent=1 // pred_check
      _
    $region27: #{tpu_custom_call.1} parent=1 // pred_check_branch
      %93 = sbr.rel (0) target = $region29
    $region28: #{tpu_custom_call.1} parent=1 // pred_region
      %s95 = ssub.s32 16, 16
      %96 = vsyncadd [#allocation12], %s95
      %s98 = sshll.u32 [#allocation11], 4
      %s99 = int_to_ptr.vmem [resolvable:$true] %s98
      %101 = dma.hbm_to_vmem [thread:$0]  %s6, 16, %s99, [#allocation12]
    $region29: #{tpu_custom_call.1} parent=1 // pred_fallthru
      _
    // Predicated region
    $region30: #{tpu_custom_call.1} parent=1 // pred_check
      _
    $region31: #{tpu_custom_call.1} parent=1 // pred_check_branch
      %103 = sbr.rel (0) target = $region33
    $region32: #{tpu_custom_call.1} parent=1 // pred_region
      %s105 = ssub.s32 128, 128
      %106 = vsyncadd [#allocation12], %s105
      %s107 = sshll.u32 [#allocation13], 4
      %s108 = int_to_ptr.vmem [resolvable:$true] %s107
      %113 = dma.hbm_to_vmem [thread:$0]  %s7, 128, %s108, [#allocation12], 64, 64, 4
    $region33: #{tpu_custom_call.1} parent=1 // pred_fallthru
      _
    // Predicated region
    $region34: #{tpu_custom_call.1} parent=1 // pred_check
      _
    $region35: #{tpu_custom_call.1} parent=1 // pred_check_branch
      %115 = sbr.rel (0) target = $region37
    $region36: #{tpu_custom_call.1} parent=1 // pred_region
      %s117 = ssub.s32 16, 16
      %118 = vsyncadd [#allocation15], %s117
      %s120 = sshll.u32 [#allocation14], 4
      %s121 = int_to_ptr.vmem [resolvable:$true] %s120
      %123 = dma.hbm_to_vmem [thread:$0]  %s8, 16, %s121, [#allocation15]
    $region37: #{tpu_custom_call.1} parent=1 // pred_fallthru
      _
    // Predicated region
    $region38: #{tpu_custom_call.1} parent=1 // pred_check
      _
    $region39: #{tpu_custom_call.1} parent=1 // pred_check_branch
      %125 = sbr.rel (0) target = $region41
    $region40: #{tpu_custom_call.1} parent=1 // pred_region
      %s127 = ssub.s32 2048, 2048
      %128 = vsyncadd [#allocation15], %s127
      %s129 = sshll.u32 [#allocation16], 4
      %s130 = int_to_ptr.vmem [resolvable:$true] %s129
      %135 = dma.hbm_to_vmem [thread:$0]  %s9, 2048, %s130, [#allocation15], 1024, 1024, 64
    $region41: #{tpu_custom_call.1} parent=1 // pred_fallthru
      _
    // Predicated region
    $region42: #{tpu_custom_call.1} parent=1 // pred_check
      _
    $region43: #{tpu_custom_call.1} parent=1 // pred_check_branch
      %137 = sbr.rel (0) target = $region45
    $region44: #{tpu_custom_call.1} parent=1 // pred_region
      _
    $region45: #{tpu_custom_call.1} parent=1 // pred_fallthru
      _
    // Predicated region
    $region46: #{tpu_custom_call.1} parent=1 // pred_check
      _
    $region47: #{tpu_custom_call.1} parent=1 // pred_check_branch
      %139 = sbr.rel (0) target = $region49
    $region48: #{tpu_custom_call.1} parent=1 // pred_region
      %s141 = ssub.s32 2048, 2048
      %142 = vsyncadd [#allocation18], %s141
      %s143 = sshll.u32 [#allocation17], 4
      %s144 = int_to_ptr.vmem [resolvable:$true] %s143
      %149 = dma.hbm_to_vmem [thread:$0]  %s11, 2048, %s144, [#allocation18], 1024, 1024, 64
    $region49: #{tpu_custom_call.1} parent=1 // pred_fallthru
      _
    // Predicated region
    $region50: #{tpu_custom_call.1} parent=1 // pred_check
      _
    $region51: #{tpu_custom_call.1} parent=1 // pred_check_branch
      %151 = sbr.rel (0) target = $region53
    $region52: #{tpu_custom_call.1} parent=1 // pred_region
      %s153 = ssub.s32 16, 16
      %154 = vsyncadd [#allocation18], %s153
      %s156 = sshll.u32 [#allocation19], 4
      %s157 = int_to_ptr.vmem [resolvable:$true] %s156
      %159 = dma.hbm_to_vmem [thread:$0]  %s12, 16, %s157, [#allocation18]
    $region53: #{tpu_custom_call.1} parent=1 // pred_fallthru
      _
    // Predicated region
    $region54: #{tpu_custom_call.1} parent=1 // pred_check
      _
    $region55: #{tpu_custom_call.1} parent=1 // pred_check_branch
      %161 = sbr.rel (0) target = $region57
    $region56: #{tpu_custom_call.1} parent=1 // pred_region
      %s163 = ssub.s32 16, 16
      %164 = vsyncadd [#allocation21], %s163
      %s166 = sshll.u32 [#allocation20], 4
      %s167 = int_to_ptr.vmem [resolvable:$true] %s166
      %169 = dma.hbm_to_vmem [thread:$0]  %s13, 16, %s167, [#allocation21]
    $region57: #{tpu_custom_call.1} parent=1 // pred_fallthru
      _
    // Predicated region
    $region58: #{tpu_custom_call.1} parent=1 // pred_check
      _
    $region59: #{tpu_custom_call.1} parent=1 // pred_check_branch
      %171 = sbr.rel (0) target = $region61
    $region60: #{tpu_custom_call.1} parent=1 // pred_region
      %s173 = ssub.s32 16, 16
      %174 = vsyncadd [#allocation21], %s173
      %s176 = sshll.u32 [#allocation22], 4
      %s177 = int_to_ptr.vmem [resolvable:$true] %s176
      %179 = dma.hbm_to_vmem [thread:$0]  %s14, 16, %s177, [#allocation21]
    $region61: #{tpu_custom_call.1} parent=1 // pred_fallthru
      _
    // Predicated region
    $region62: #{tpu_custom_call.1} parent=1 // pred_check
      _
    $region63: #{tpu_custom_call.1} parent=1 // pred_check_branch
      %181 = sbr.rel (0) target = $region65
    $region64: #{tpu_custom_call.1} parent=1 // pred_region
      _
    $region65: #{tpu_custom_call.1} parent=1 // pred_fallthru
      _
    // Predicated region
    $region66: #{tpu_custom_call.1} parent=1 // pred_check
      _
    $region67: #{tpu_custom_call.1} parent=1 // pred_check_branch
      %183 = sbr.rel (0) target = $region69
    $region68: #{tpu_custom_call.1} parent=1 // pred_region
      _
    $region69: #{tpu_custom_call.1} parent=1 // pred_fallthru
      _
    // Predicated region
    $region70: #{tpu_custom_call.1} parent=1 // pred_check
      _
    $region71: #{tpu_custom_call.1} parent=1 // pred_check_branch
      %185 = sbr.rel (0) target = $region73
    $region72: #{tpu_custom_call.1} parent=1 // pred_region
      _
    $region73: #{tpu_custom_call.1} parent=1 // pred_fallthru
      _
    // Predicated region
    $region74: #{tpu_custom_call.1} parent=1 // pred_check
      _
    $region75: #{tpu_custom_call.1} parent=1 // pred_check_branch
      %187 = sbr.rel (0) target = $region77
    $region76: #{tpu_custom_call.1} parent=1 // pred_region
      _
    $region77: #{tpu_custom_call.1} parent=1 // pred_fallthru
      _
    // Predicated region
    $region78: #{tpu_custom_call.1} parent=1 // pred_check
      _
    $region79: #{tpu_custom_call.1} parent=1 // pred_check_branch
      %189 = sbr.rel (0) target = $region81
    $region80: #{tpu_custom_call.1} parent=1 // pred_region
      %190 = dma.done [#allocation3], 256
    $region81: #{tpu_custom_call.1} parent=1 // pred_fallthru
      _
    // Predicated region
    $region82: #{tpu_custom_call.1} parent=1 // pred_check
      _
    $region83: #{tpu_custom_call.1} parent=1 // pred_check_branch
      %192 = sbr.rel (0) target = $region85
    $region84: #{tpu_custom_call.1} parent=1 // pred_region
      %193 = dma.done [#allocation6], 128
    $region85: #{tpu_custom_call.1} parent=1 // pred_fallthru
      _
    // Predicated region
    $region86: #{tpu_custom_call.1} parent=1 // pred_check
      _
    $region87: #{tpu_custom_call.1} parent=1 // pred_check_branch
      %195 = sbr.rel (0) target = $region89
    $region88: #{tpu_custom_call.1} parent=1 // pred_region
      %196 = dma.done [#allocation6], 128
    $region89: #{tpu_custom_call.1} parent=1 // pred_fallthru
      _
    // Predicated region
    $region90: #{tpu_custom_call.1} parent=1 // pred_check
      _
    $region91: #{tpu_custom_call.1} parent=1 // pred_check_branch
      %198 = sbr.rel (0) target = $region93
    $region92: #{tpu_custom_call.1} parent=1 // pred_region
      %199 = dma.done [#allocation9], 16
    $region93: #{tpu_custom_call.1} parent=1 // pred_fallthru
      _
    // Predicated region
    $region94: #{tpu_custom_call.1} parent=1 // pred_check
      _
    $region95: #{tpu_custom_call.1} parent=1 // pred_check_branch
      %201 = sbr.rel (0) target = $region97
    $region96: #{tpu_custom_call.1} parent=1 // pred_region
      %202 = dma.done [#allocation9], 128
    $region97: #{tpu_custom_call.1} parent=1 // pred_fallthru
      _
    // Predicated region
    $region98: #{tpu_custom_call.1} parent=1 // pred_check
      _
    $region99: #{tpu_custom_call.1} parent=1 // pred_check_branch
      %204 = sbr.rel (0) target = $region101
    $region100: #{tpu_custom_call.1} parent=1 // pred_region
      %205 = dma.done [#allocation12], 16
    $region101: #{tpu_custom_call.1} parent=1 // pred_fallthru
      _
    // Predicated region
    $region102: #{tpu_custom_call.1} parent=1 // pred_check
      _
    $region103: #{tpu_custom_call.1} parent=1 // pred_check_branch
      %207 = sbr.rel (0) target = $region105
    $region104: #{tpu_custom_call.1} parent=1 // pred_region
      %208 = dma.done [#allocation12], 128
    $region105: #{tpu_custom_call.1} parent=1 // pred_fallthru
      _
    // Predicated region
    $region106: #{tpu_custom_call.1} parent=1 // pred_check
      _
    $region107: #{tpu_custom_call.1} parent=1 // pred_check_branch
      %210 = sbr.rel (0) target = $region109
    $region108: #{tpu_custom_call.1} parent=1 // pred_region
      %211 = dma.done [#allocation15], 16
    $region109: #{tpu_custom_call.1} parent=1 // pred_fallthru
      _
    // Predicated region
    $region110: #{tpu_custom_call.1} parent=1 // pred_check
      _
    $region111: #{tpu_custom_call.1} parent=1 // pred_check_branch
      %213 = sbr.rel (0) target = $region113
    $region112: #{tpu_custom_call.1} parent=1 // pred_region
      %214 = dma.done [#allocation15], 2048
    $region113: #{tpu_custom_call.1} parent=1 // pred_fallthru
      _
    // Predicated region
    $region114: #{tpu_custom_call.1} parent=1 // pred_check
      _
    $region115: #{tpu_custom_call.1} parent=1 // pred_check_branch
      %216 = sbr.rel (0) target = $region117
    $region116: #{tpu_custom_call.1} parent=1 // pred_region
      %217 = dma.done [#allocation18], 2048
    $region117: #{tpu_custom_call.1} parent=1 // pred_fallthru
      _
    // Predicated region
    $region118: #{tpu_custom_call.1} parent=1 // pred_check
      _
    $region119: #{tpu_custom_call.1} parent=1 // pred_check_branch
      %219 = sbr.rel (0) target = $region121
    $region120: #{tpu_custom_call.1} parent=1 // pred_region
      %220 = dma.done [#allocation18], 16
    $region121: #{tpu_custom_call.1} parent=1 // pred_fallthru
      _
    // Predicated region
    $region122: #{tpu_custom_call.1} parent=1 // pred_check
      _
    $region123: #{tpu_custom_call.1} parent=1 // pred_check_branch
      %222 = sbr.rel (0) target = $region125
    $region124: #{tpu_custom_call.1} parent=1 // pred_region
      %223 = dma.done [#allocation21], 16
    $region125: #{tpu_custom_call.1} parent=1 // pred_fallthru
      _
    // Predicated region
    $region126: #{tpu_custom_call.1} parent=1 // pred_check
      _
    $region127: #{tpu_custom_call.1} parent=1 // pred_check_branch
      %225 = sbr.rel (0) target = $region129
    $region128: #{tpu_custom_call.1} parent=1 // pred_region
      %226 = dma.done [#allocation21], 16
    $region129: #{tpu_custom_call.1} parent=1 // pred_fallthru
      _
    %v228 = vld [vmem:[#allocation2] sm:$0xff]
    %v229 = vld [vmem:[#allocation2 + $0x8] sm:$0xff]
    %v230 = vpack.c.bf16 %v229, %v228
    %v231 = vld [vmem:[#allocation5] sm:$0xf]
    %v232 = vld [vmem:[#allocation5 + $0x4] sm:$0xf]
    %v233 = vld [vmem:[%s2] sm:$0x1]
    %v235 = vlaneseq
    %v236 = vshrl.u32 %v235, 7
    %v237 = vsub.s32 0, %v236
    %v238 = vrot.slane %v233, %v237
    %v242 = vunpack.c.l.b16 %v231
    %v243 = vunpack.c.l.b16 %v232
    %v244 = vpack.c.b16 %v243, %v242
    %vm246 = vcmask 130048
    %v248 = vsel %vm246, %v230, 0
    %250 = vmatprep.subr.bf16.mxu0 0
    %251 = vmatpush1.bf16.msra.mxu0 0
    %252 = vmatprep.subr.bf16.mxu0 0
    %253 = vmatpush1.bf16.msra.mxu0 0
    %254 = vmatprep.subr.bf16.mxu0 0
    %255 = vmatpush1.bf16.msra.mxu0 0
    %256 = vmatprep.subr.bf16.mxu0 0
    %257 = vmatpush1.bf16.msra.mxu0 0
    %258 = vmatprep.subr.bf16.mxu0 0
    %259 = vmatpush1.bf16.msra.mxu0 0
    %260 = vmatprep.subr.bf16.mxu0 0
    %261 = vmatpush1.bf16.msra.mxu0 0
    %262 = vmatprep.subr.bf16.mxu0 0
    %263 = vmatpush1.bf16.msra.mxu0 0
    %264 = vmatprep.subr.bf16.mxu0 0
    %265 = vmatpush1.bf16.msra.mxu0 %v244
    %266 = vmatprep.subr.bf16.mxu0 0
    %267 = vmatpush2.bf16.msra.mxu0 0
    %268 = vmatprep.subr.bf16.mxu0 0
    %269 = vmatpush2.bf16.msra.mxu0 0
    %270 = vmatprep.subr.bf16.mxu0 0
    %271 = vmatpush2.bf16.msra.mxu0 0
    %272 = vmatprep.subr.bf16.mxu0 0
    %273 = vmatpush2.bf16.msra.mxu0 0
    %274 = vmatprep.subr.bf16.mxu0 0
    %275 = vmatpush2.bf16.msra.mxu0 0
    %276 = vmatprep.subr.bf16.mxu0 0
    %277 = vmatpush2.bf16.msra.mxu0 0
    %278 = vmatprep.subr.bf16.mxu0 0
    %279 = vmatpush2.bf16.msra.mxu0 0
    %280 = vmatprep.subr.bf16.mxu0 0
    %281 = vmatpush2.bf16.msra.mxu0 0
    %282 = vmatprep.mubr.bf16.mxu0 0
    %283 = vmatmul.mubr.bf16.gmra.mxu0 %v248
    %v284 = vpop.f32.mrf.mxu0
    %v285 = vadd.f32 %v238, %v284
    %v286 = vpop.f32.mrf.mxu0
    %v287 = vpop.f32.mrf.mxu0
    %v288 = vadd.f32 %v238, %v287
    %v289 = vpop.f32.mrf.mxu0
    %290 = vdwg.mxu0
    %v291 = vld [vmem:[#allocation7] sm:$0xf]
    %v292 = vld [vmem:[#allocation7 + $0x4] sm:$0xf]
    %v293 = vld [vmem:[#allocation8] sm:$0x1]
    %v295 = vlaneseq
    %v296 = vshrl.u32 %v295, 7
    %v297 = vsub.s32 0, %v296
    %v298 = vrot.slane %v293, %v297
    %v302 = vunpack.c.l.b16 %v291
    %v303 = vunpack.c.l.b16 %v292
    %v304 = vpack.c.b16 %v303, %v302
    %306 = vmatprep.subr.bf16.mxu0 0
    %307 = vmatpush1.bf16.msra.mxu0 0
    %308 = vmatprep.subr.bf16.mxu0 0
    %309 = vmatpush1.bf16.msra.mxu0 0
    %310 = vmatprep.subr.bf16.mxu0 0
    %311 = vmatpush1.bf16.msra.mxu0 0
    %312 = vmatprep.subr.bf16.mxu0 0
    %313 = vmatpush1.bf16.msra.mxu0 0
    %314 = vmatprep.subr.bf16.mxu0 0
    %315 = vmatpush1.bf16.msra.mxu0 0
    %316 = vmatprep.subr.bf16.mxu0 0
    %317 = vmatpush1.bf16.msra.mxu0 0
    %318 = vmatprep.subr.bf16.mxu0 0
    %319 = vmatpush1.bf16.msra.mxu0 0
    %320 = vmatprep.subr.bf16.mxu0 0
    %321 = vmatpush1.bf16.msra.mxu0 %v304
    %322 = vmatprep.subr.bf16.mxu0 0
    %323 = vmatpush2.bf16.msra.mxu0 0
    %324 = vmatprep.subr.bf16.mxu0 0
    %325 = vmatpush2.bf16.msra.mxu0 0
    %326 = vmatprep.subr.bf16.mxu0 0
    %327 = vmatpush2.bf16.msra.mxu0 0
    %328 = vmatprep.subr.bf16.mxu0 0
    %329 = vmatpush2.bf16.msra.mxu0 0
    %330 = vmatprep.subr.bf16.mxu0 0
    %331 = vmatpush2.bf16.msra.mxu0 0
    %332 = vmatprep.subr.bf16.mxu0 0
    %333 = vmatpush2.bf16.msra.mxu0 0
    %334 = vmatprep.subr.bf16.mxu0 0
    %335 = vmatpush2.bf16.msra.mxu0 0
    %336 = vmatprep.subr.bf16.mxu0 0
    %337 = vmatpush2.bf16.msra.mxu0 0
    %338 = vmatprep.mubr.bf16.mxu0 0
    %339 = vmatmul.mubr.bf16.gmra.mxu0 %v248
    %v340 = vpop.f32.mrf.mxu0
    %v341 = vadd.f32 %v298, %v340
    %v342 = vpop.f32.mrf.mxu0
    %v343 = vpop.f32.mrf.mxu0
    %v344 = vadd.f32 %v298, %v343
    %v345 = vpop.f32.mrf.mxu0
    %346 = vdwg.mxu0
    %v347 = vld [vmem:[#allocation10] sm:$0xf]
    %v348 = vld [vmem:[#allocation10 + $0x4] sm:$0xf]
    %v349 = vld [vmem:[#allocation11] sm:$0x1]
    %v351 = vlaneseq
    %v352 = vshrl.u32 %v351, 7
    %v353 = vsub.s32 0, %v352
    %v354 = vrot.slane %v349, %v353
    %v358 = vunpack.c.l.b16 %v347
    %v359 = vunpack.c.l.b16 %v348
    %v360 = vpack.c.b16 %v359, %v358
    %362 = vmatprep.subr.bf16.mxu0 0
    %363 = vmatpush1.bf16.msra.mxu0 0
    %364 = vmatprep.subr.bf16.mxu0 0
    %365 = vmatpush1.bf16.msra.mxu0 0
    %366 = vmatprep.subr.bf16.mxu0 0
    %367 = vmatpush1.bf16.msra.mxu0 0
    %368 = vmatprep.subr.bf16.mxu0 0
    %369 = vmatpush1.bf16.msra.mxu0 0
    %370 = vmatprep.subr.bf16.mxu0 0
    %371 = vmatpush1.bf16.msra.mxu0 0
    %372 = vmatprep.subr.bf16.mxu0 0
    %373 = vmatpush1.bf16.msra.mxu0 0
    %374 = vmatprep.subr.bf16.mxu0 0
    %375 = vmatpush1.bf16.msra.mxu0 0
    %376 = vmatprep.subr.bf16.mxu0 0
    %377 = vmatpush1.bf16.msra.mxu0 %v360
    %378 = vmatprep.subr.bf16.mxu0 0
    %379 = vmatpush2.bf16.msra.mxu0 0
    %380 = vmatprep.subr.bf16.mxu0 0
    %381 = vmatpush2.bf16.msra.mxu0 0
    %382 = vmatprep.subr.bf16.mxu0 0
    %383 = vmatpush2.bf16.msra.mxu0 0
    %384 = vmatprep.subr.bf16.mxu0 0
    %385 = vmatpush2.bf16.msra.mxu0 0
    %386 = vmatprep.subr.bf16.mxu0 0
    %387 = vmatpush2.bf16.msra.mxu0 0
    %388 = vmatprep.subr.bf16.mxu0 0
    %389 = vmatpush2.bf16.msra.mxu0 0
    %390 = vmatprep.subr.bf16.mxu0 0
    %391 = vmatpush2.bf16.msra.mxu0 0
    %392 = vmatprep.subr.bf16.mxu0 0
    %393 = vmatpush2.bf16.msra.mxu0 0
    %394 = vmatprep.mubr.bf16.mxu0 0
    %395 = vmatmul.mubr.bf16.gmra.mxu0 %v248
    %v396 = vpop.f32.mrf.mxu0
    %v397 = vadd.f32 %v354, %v396
    %v398 = vpop.f32.mrf.mxu0
    %v399 = vpop.f32.mrf.mxu0
    %v400 = vadd.f32 %v354, %v399
    %v401 = vpop.f32.mrf.mxu0
    %402 = vdwg.mxu0
    %v403 = vpack.c.bf16 %v288, %v285
    %v404 = vpack.c.bf16 %v344, %v341
    %v406 = vsel %vm246, %v403, 0
    %v409 = vsel %vm246, %v404, 0
    %411 = vmatprep.subr.bf16.mxu0 0
    %412 = vmatpush1.bf16.xpose.msra.mxu0 0
    %413 = vmatprep.subr.bf16.mxu0 0
    %414 = vmatpush1.bf16.xpose.msra.mxu0 0
    %415 = vmatprep.subr.bf16.mxu0 0
    %416 = vmatpush1.bf16.xpose.msra.mxu0 0
    %417 = vmatprep.subr.bf16.mxu0 0
    %418 = vmatpush1.bf16.xpose.msra.mxu0 0
    %419 = vmatprep.subr.bf16.mxu0 0
    %420 = vmatpush1.bf16.xpose.msra.mxu0 0
    %421 = vmatprep.subr.bf16.mxu0 0
    %422 = vmatpush1.bf16.xpose.msra.mxu0 0
    %423 = vmatprep.subr.bf16.mxu0 0
    %424 = vmatpush1.bf16.xpose.msra.mxu0 0
    %425 = vmatprep.subr.bf16.mxu0 0
    %426 = vmatpush1.bf16.xpose.msra.mxu0 %v409
    %427 = vmatprep.subr.bf16.mxu0 0
    %428 = vmatpush2.bf16.xpose.msra.mxu0 0
    %429 = vmatprep.subr.bf16.mxu0 0
    %430 = vmatpush2.bf16.xpose.msra.mxu0 0
    %431 = vmatprep.subr.bf16.mxu0 0
    %432 = vmatpush2.bf16.xpose.msra.mxu0 0
    %433 = vmatprep.subr.bf16.mxu0 0
    %434 = vmatpush2.bf16.xpose.msra.mxu0 0
    %435 = vmatprep.subr.bf16.mxu0 0
    %436 = vmatpush2.bf16.xpose.msra.mxu0 0
    %437 = vmatprep.subr.bf16.mxu0 0
    %438 = vmatpush2.bf16.xpose.msra.mxu0 0
    %439 = vmatprep.subr.bf16.mxu0 0
    %440 = vmatpush2.bf16.xpose.msra.mxu0 0
    %441 = vmatprep.subr.bf16.mxu0 0
    %442 = vmatpush2.bf16.xpose.msra.mxu0 0
    %443 = vmatprep.mubr.bf16.mxu0 0
    %444 = vmatmul.mubr.bf16.gmra.mxu0 %v406
    %v445 = vpop.f32.mrf.mxu0
    %v446 = vadd.f32 0.0, %v445
    %v447 = vpop.f32.mrf.mxu0
    %v448 = vpop.f32.mrf.mxu0
    %v449 = vadd.f32 0.0, %v448
    %v450 = vpop.f32.mrf.mxu0
    %451 = vdwg.mxu0
    %v452 = vlaneseq
    %v453 = vshrl.u32 %v452, 7
    %v454 = vadd.s32 %v453, 8
    %vm455 = vcmp.lt.s32.totalorder %v453, 0
    %v456 = vsub.s32 0, %v453
    %v457 = vsel %vm455, %v456, %v453
    %v458 = vshrl.u32 %v457, 1
    %v459 = vand.u32 %v457, 1
    %v460 = vsub.s32 0, %v459
    %v461 = vsel %vm455, %v460, %v459
    %vm462 = vcmp.lt.s32.totalorder %v454, 0
    %v463 = vsub.s32 0, %v454
    %v464 = vsel %vm462, %v463, %v454
    %v465 = vshrl.u32 %v464, 1
    %v466 = vand.u32 %v464, 1
    %v467 = vsub.s32 0, %v466
    %v468 = vsel %vm462, %v467, %v466
    %vm469 = vcmp.ne.s32.totalorder %v461, 0
    %vm470 = vcmp.ne.s32.totalorder %v468, 0
    %vm471 = vcmp.lt.s32.totalorder %v461, 0
    %vm472 = vcmp.lt.s32.totalorder %v468, 0
    %vm473 = vmand %vm471, %vm469
    %vm474 = vmand %vm472, %vm470
    %v475 = vadd.s32 %v461, 2
    %v476 = vadd.s32 %v468, 2
    %v477 = vsel %vm473, %v475, %v461
    %v478 = vsel %vm474, %v476, %v468
    %v479 = vlaneseq
    %v480 = vand.u32 %v479, 127
    %vm481 = vcmp.lt.s32.totalorder %v480, 0
    %v482 = vsub.s32 0, %v480
    %v483 = vsel %vm481, %v482, %v480
    %v484 = vshrl.u32 %v483, 1
    %v485 = vand.u32 %v483, 1
    %v486 = vsub.s32 0, %v485
    %v487 = vsel %vm481, %v486, %v485
    %vm488 = vcmp.ne.s32.totalorder %v487, 0
    %vm489 = vcmp.lt.s32.totalorder %v487, 0
    %vm490 = vmand %vm489, %vm488
    %v491 = vadd.s32 %v487, 2
    %v492 = vsel %vm490, %v491, %v487
    %vm493 = vcmp.eq.s32.totalorder %v477, %v492
    %vm494 = vcmp.eq.s32.totalorder %v478, %v492
    %v495 = vsel %vm493, %v446, -1e+30
    %v496 = vsel %vm494, %v449, -1e+30
    %v497 = vsel %vm246, %v495, -inf
    %498 = vmax.xlane.f32.xlu0 %v497
    %v499 = vpop.xlane.xlu0 %498
    %v500 = vsel %vm246, %v496, -inf
    %501 = vmax.xlane.f32.xlu0 %v500
    %v502 = vpop.xlane.xlu0 %501
    %v503 = vsub.f32 %v495, %v499
    %v504 = vsub.f32 %v496, %v502
    %v505 = vmul.f32 %v503, 1.442695
    %v506 = vpow.pop %v505
    %v507 = vmul.f32 %v504, 1.442695
    %v508 = vpow.pop %v507
    %v509 = vsel %vm246, %v506, 0.0
    %510 = vadd.xlane.f32.xlu0 %v509
    %v511 = vpop.xlane.xlu0 %510
    %v512 = vsel %vm246, %v508, 0.0
    %513 = vadd.xlane.f32.xlu0 %v512
    %v514 = vpop.xlane.xlu0 %513
    %v515 = vrcp.pop %v511
    %v516 = vrcp.pop %v514
    %v517 = vmul.f32 %v506, %v515
    %v518 = vmul.f32 %v508, %v516
    %v519 = vpack.c.bf16 %v518, %v517
    %v520 = vpack.c.bf16 %v400, %v397
    %v522 = vsel %vm246, %v519, 0
    %524 = vmatprep.subr.bf16.mxu0 0
    %525 = vmatpush1.bf16.msra.mxu0 0
    %526 = vmatprep.subr.bf16.mxu0 0
    %527 = vmatpush1.bf16.msra.mxu0 0
    %528 = vmatprep.subr.bf16.mxu0 0
    %529 = vmatpush1.bf16.msra.mxu0 0
    %530 = vmatprep.subr.bf16.mxu0 0
    %531 = vmatpush1.bf16.msra.mxu0 0
    %532 = vmatprep.subr.bf16.mxu0 0
    %533 = vmatpush1.bf16.msra.mxu0 0
    %534 = vmatprep.subr.bf16.mxu0 0
    %535 = vmatpush1.bf16.msra.mxu0 0
    %536 = vmatprep.subr.bf16.mxu0 0
    %537 = vmatpush1.bf16.msra.mxu0 0
    %538 = vmatprep.subr.bf16.mxu0 0
    %539 = vmatpush1.bf16.msra.mxu0 %v520
    %540 = vmatprep.subr.bf16.mxu0 0
    %541 = vmatpush2.bf16.msra.mxu0 0
    %542 = vmatprep.subr.bf16.mxu0 0
    %543 = vmatpush2.bf16.msra.mxu0 0
    %544 = vmatprep.subr.bf16.mxu0 0
    %545 = vmatpush2.bf16.msra.mxu0 0
    %546 = vmatprep.subr.bf16.mxu0 0
    %547 = vmatpush2.bf16.msra.mxu0 0
    %548 = vmatprep.subr.bf16.mxu0 0
    %549 = vmatpush2.bf16.msra.mxu0 0
    %550 = vmatprep.subr.bf16.mxu0 0
    %551 = vmatpush2.bf16.msra.mxu0 0
    %552 = vmatprep.subr.bf16.mxu0 0
    %553 = vmatpush2.bf16.msra.mxu0 0
    %554 = vmatprep.subr.bf16.mxu0 0
    %555 = vmatpush2.bf16.msra.mxu0 0
    %556 = vmatprep.mubr.bf16.mxu0 0
    %557 = vmatmul.mubr.bf16.gmra.mxu0 %v522
    %v558 = vpop.f32.mrf.mxu0
    %v559 = vadd.f32 0.0, %v558
    %v560 = vpop.f32.mrf.mxu0
    %v561 = vpop.f32.mrf.mxu0
    %v562 = vadd.f32 0.0, %v561
    %v563 = vpop.f32.mrf.mxu0
    %564 = vdwg.mxu0
    %v565 = vpack.c.bf16 %v562, %v559
    %v566 = vld [vmem:[#allocation13] sm:$0xf]
    %v567 = vld [vmem:[#allocation13 + $0x4] sm:$0xf]
    %v568 = vld [vmem:[#allocation14] sm:$0x1]
    %v570 = vlaneseq
    %v571 = vshrl.u32 %v570, 7
    %v572 = vsub.s32 0, %v571
    %v573 = vrot.slane %v568, %v572
    %v577 = vunpack.c.l.b16 %v566
    %v578 = vunpack.c.l.b16 %v567
    %v579 = vpack.c.b16 %v578, %v577
    %v582 = vsel %vm246, %v565, 0
    %584 = vmatprep.subr.bf16.mxu0 0
    %585 = vmatpush1.bf16.msra.mxu0 0
    %586 = vmatprep.subr.bf16.mxu0 0
    %587 = vmatpush1.bf16.msra.mxu0 0
    %588 = vmatprep.subr.bf16.mxu0 0
    %589 = vmatpush1.bf16.msra.mxu0 0
    %590 = vmatprep.subr.bf16.mxu0 0
    %591 = vmatpush1.bf16.msra.mxu0 0
    %592 = vmatprep.subr.bf16.mxu0 0
    %593 = vmatpush1.bf16.msra.mxu0 0
    %594 = vmatprep.subr.bf16.mxu0 0
    %595 = vmatpush1.bf16.msra.mxu0 0
    %596 = vmatprep.subr.bf16.mxu0 0
    %597 = vmatpush1.bf16.msra.mxu0 0
    %598 = vmatprep.subr.bf16.mxu0 0
    %599 = vmatpush1.bf16.msra.mxu0 %v579
    %600 = vmatprep.subr.bf16.mxu0 0
    %601 = vmatpush2.bf16.msra.mxu0 0
    %602 = vmatprep.subr.bf16.mxu0 0
    %603 = vmatpush2.bf16.msra.mxu0 0
    %604 = vmatprep.subr.bf16.mxu0 0
    %605 = vmatpush2.bf16.msra.mxu0 0
    %606 = vmatprep.subr.bf16.mxu0 0
    %607 = vmatpush2.bf16.msra.mxu0 0
    %608 = vmatprep.subr.bf16.mxu0 0
    %609 = vmatpush2.bf16.msra.mxu0 0
    %610 = vmatprep.subr.bf16.mxu0 0
    %611 = vmatpush2.bf16.msra.mxu0 0
    %612 = vmatprep.subr.bf16.mxu0 0
    %613 = vmatpush2.bf16.msra.mxu0 0
    %614 = vmatprep.subr.bf16.mxu0 0
    %615 = vmatpush2.bf16.msra.mxu0 0
    %616 = vmatprep.mubr.bf16.mxu0 0
    %617 = vmatmul.mubr.bf16.gmra.mxu0 %v582
    %v618 = vpop.f32.mrf.mxu0
    %v619 = vadd.f32 %v573, %v618
    %v620 = vpop.f32.mrf.mxu0
    %v621 = vpop.f32.mrf.mxu0
    %v622 = vadd.f32 %v573, %v621
    %v623 = vpop.f32.mrf.mxu0
    %624 = vdwg.mxu0
    %v625 = vadd.f32 %v228, %v619
    %v626 = vadd.f32 %v229, %v622
    %v627 = vld [vmem:[#allocation20] sm:$0x1]
    %v628 = vld [vmem:[#allocation22] sm:$0x1]
    %v629 = vsel %vm246, %v625, 0.0
    %630 = vadd.xlane.f32.xlu0 %v629
    %v631 = vpop.xlane.xlu0 %630
    %v632 = vsel %vm246, %v626, 0.0
    %633 = vadd.xlane.f32.xlu0 %v632
    %v634 = vpop.xlane.xlu0 %633
    %v635 = vrcp.pop 16.0
    %v636 = vmul.f32 %v631, %v635
    %v637 = vmul.f32 %v634, %v635
    %v638 = vsub.f32 %v625, %v636
    %v639 = vsub.f32 %v626, %v637
    %v640 = vmul.f32 %v638, %v638
    %v641 = vmul.f32 %v639, %v639
    %v642 = vsel %vm246, %v640, 0.0
    %643 = vadd.xlane.f32.xlu0 %v642
    %v644 = vpop.xlane.xlu0 %643
    %v645 = vsel %vm246, %v641, 0.0
    %646 = vadd.xlane.f32.xlu0 %v645
    %v647 = vpop.xlane.xlu0 %646
    %v648 = vmul.f32 %v644, %v635
    %v649 = vmul.f32 %v647, %v635
    %v650 = vadd.f32 %v648, 1e-05
    %v651 = vadd.f32 %v649, 1e-05
    %v652 = vrsqrt.pop %v650
    %v653 = vrsqrt.pop %v651
    %v654 = vmul.f32 %v638, %v652
    %v655 = vmul.f32 %v639, %v653
    %v657 = vlaneseq
    %v658 = vshrl.u32 %v657, 7
    %v659 = vsub.s32 0, %v658
    %v660 = vrot.slane %v627, %v659
    %v662 = vmul.f32 %v654, %v660
    %v663 = vmul.f32 %v655, %v660
    %v665 = vlaneseq
    %v666 = vshrl.u32 %v665, 7
    %v667 = vsub.s32 0, %v666
    %v668 = vrot.slane %v628, %v667
    %v670 = vadd.f32 %v662, %v668
    %v671 = vadd.f32 %v663, %v668
    %v672 = vpack.c.bf16 %v671, %v670
    %v673 = vld [vmem:[#allocation16] sm:$0xff]
    %v674 = vld [vmem:[#allocation16 + $0x8] sm:$0xff]
    %v675 = vld [vmem:[#allocation16 + $0x40] sm:$0xff]
    %v676 = vld [vmem:[#allocation16 + $0x48] sm:$0xff]
    %v677 = vld [vmem:[%s10] sm:$0xf]
    %v679 = vlaneseq
    %v680 = vshrl.u32 %v679, 7
    %v681 = vsub.s32 0, %v680
    %v682 = vrot.slane %v677, %v681
    %v683 = vlaneseq
    %v684 = vshrl.u32 %v683, 7
    %v685 = vsub.s32 1, %v684
    %v686 = vrot.slane %v677, %v685
    %v687 = vlaneseq
    %v688 = vshrl.u32 %v687, 7
    %v689 = vsub.s32 2, %v688
    %v690 = vrot.slane %v677, %v689
    %v691 = vlaneseq
    %v692 = vshrl.u32 %v691, 7
    %v693 = vsub.s32 3, %v692
    %v694 = vrot.slane %v677, %v693
    %v703 = vunpack.c.l.b16 %v673
    %v704 = vunpack.c.h.b16 %v673
    %v705 = vunpack.c.l.b16 %v674
    %v706 = vunpack.c.h.b16 %v674
    %v707 = vunpack.c.l.b16 %v675
    %v708 = vunpack.c.h.b16 %v675
    %v709 = vunpack.c.l.b16 %v676
    %v710 = vunpack.c.h.b16 %v676
    %v711 = vpack.c.b16 %v707, %v703
    %v712 = vpack.c.b16 %v708, %v704
    %v713 = vpack.c.b16 %v709, %v705
    %v714 = vpack.c.b16 %v710, %v706
    %v720 = vsel %vm246, %v672, 0
    %722 = vmatprep.subr.bf16.mxu0 0
    %723 = vmatpush1.bf16.msra.mxu0 0
    %724 = vmatprep.subr.bf16.mxu0 0
    %725 = vmatpush1.bf16.msra.mxu0 0
    %726 = vmatprep.subr.bf16.mxu0 0
    %727 = vmatpush1.bf16.msra.mxu0 0
    %728 = vmatprep.subr.bf16.mxu0 0
    %729 = vmatpush1.bf16.msra.mxu0 0
    %730 = vmatprep.subr.bf16.mxu0 0
    %731 = vmatpush1.bf16.msra.mxu0 0
    %732 = vmatprep.subr.bf16.mxu0 0
    %733 = vmatpush1.bf16.msra.mxu0 0
    %734 = vmatprep.subr.bf16.mxu0 0
    %735 = vmatpush1.bf16.msra.mxu0 0
    %736 = vmatprep.subr.bf16.mxu0 %v712
    %737 = vmatpush1.bf16.msra.mxu0 %v711
    %738 = vmatprep.subr.bf16.mxu0 0
    %739 = vmatpush2.bf16.msra.mxu0 0
    %740 = vmatprep.subr.bf16.mxu0 0
    %741 = vmatpush2.bf16.msra.mxu0 0
    %742 = vmatprep.subr.bf16.mxu0 0
    %743 = vmatpush2.bf16.msra.mxu0 0
    %744 = vmatprep.subr.bf16.mxu0 0
    %745 = vmatpush2.bf16.msra.mxu0 0
    %746 = vmatprep.subr.bf16.mxu0 0
    %747 = vmatpush2.bf16.msra.mxu0 0
    %748 = vmatprep.subr.bf16.mxu0 0
    %749 = vmatpush2.bf16.msra.mxu0 0
    %750 = vmatprep.subr.bf16.mxu0 0
    %751 = vmatpush2.bf16.msra.mxu0 0
    %752 = vmatprep.subr.bf16.mxu0 0
    %753 = vmatpush2.bf16.msra.mxu0 0
    %754 = vmatprep.mubr.bf16.mxu0 0
    %755 = vmatmul.mubr.bf16.gmra.mxu0 %v720
    %v756 = vpop.f32.mrf.mxu0
    %v757 = vadd.f32 %v682, %v756
    %v758 = vpop.f32.mrf.mxu0
    %v759 = vadd.f32 %v686, %v758
    %v760 = vpop.f32.mrf.mxu0
    %v761 = vadd.f32 %v682, %v760
    %v762 = vpop.f32.mrf.mxu0
    %v763 = vadd.f32 %v686, %v762
    %764 = vdwg.mxu0
    %765 = vmatprep.subr.bf16.mxu0 0
    %766 = vmatpush1.bf16.msra.mxu0 0
    %767 = vmatprep.subr.bf16.mxu0 0
    %768 = vmatpush1.bf16.msra.mxu0 0
    %769 = vmatprep.subr.bf16.mxu0 0
    %770 = vmatpush1.bf16.msra.mxu0 0
    %771 = vmatprep.subr.bf16.mxu0 0
    %772 = vmatpush1.bf16.msra.mxu0 0
    %773 = vmatprep.subr.bf16.mxu0 0
    %774 = vmatpush1.bf16.msra.mxu0 0
    %775 = vmatprep.subr.bf16.mxu0 0
    %776 = vmatpush1.bf16.msra.mxu0 0
    %777 = vmatprep.subr.bf16.mxu0 0
    %778 = vmatpush1.bf16.msra.mxu0 0
    %779 = vmatprep.subr.bf16.mxu0 %v714
    %780 = vmatpush1.bf16.msra.mxu0 %v713
    %781 = vmatprep.subr.bf16.mxu0 0
    %782 = vmatpush2.bf16.msra.mxu0 0
    %783 = vmatprep.subr.bf16.mxu0 0
    %784 = vmatpush2.bf16.msra.mxu0 0
    %785 = vmatprep.subr.bf16.mxu0 0
    %786 = vmatpush2.bf16.msra.mxu0 0
    %787 = vmatprep.subr.bf16.mxu0 0
    %788 = vmatpush2.bf16.msra.mxu0 0
    %789 = vmatprep.subr.bf16.mxu0 0
    %790 = vmatpush2.bf16.msra.mxu0 0
    %791 = vmatprep.subr.bf16.mxu0 0
    %792 = vmatpush2.bf16.msra.mxu0 0
    %793 = vmatprep.subr.bf16.mxu0 0
    %794 = vmatpush2.bf16.msra.mxu0 0
    %795 = vmatprep.subr.bf16.mxu0 0
    %796 = vmatpush2.bf16.msra.mxu0 0
    %797 = vmatprep.mubr.bf16.mxu0 0
    %798 = vmatmul.mubr.bf16.gmra.mxu0 %v720
    %v799 = vpop.f32.mrf.mxu0
    %v800 = vadd.f32 %v690, %v799
    %v801 = vpop.f32.mrf.mxu0
    %v802 = vadd.f32 %v694, %v801
    %v803 = vpop.f32.mrf.mxu0
    %v804 = vadd.f32 %v690, %v803
    %v805 = vpop.f32.mrf.mxu0
    %v806 = vadd.f32 %v694, %v805
    %807 = vdwg.mxu0
    %v808 = vmax.f32 %v757, 0.0
    %v809 = vmax.f32 %v759, 0.0
    %v810 = vmax.f32 %v800, 0.0
    %v811 = vmax.f32 %v802, 0.0
    %v812 = vmax.f32 %v761, 0.0
    %v813 = vmax.f32 %v763, 0.0
    %v814 = vmax.f32 %v804, 0.0
    %v815 = vmax.f32 %v806, 0.0
    %v816 = vpack.c.bf16 %v812, %v808
    %v817 = vpack.c.bf16 %v813, %v809
    %v818 = vpack.c.bf16 %v814, %v810
    %v819 = vpack.c.bf16 %v815, %v811
    %v820 = vld [vmem:[#allocation17] sm:$0xff]
    %v821 = vld [vmem:[#allocation17 + $0x8] sm:$0xff]
    %v822 = vld [vmem:[#allocation17 + $0x40] sm:$0xff]
    %v823 = vld [vmem:[#allocation17 + $0x48] sm:$0xff]
    %v824 = vld [vmem:[#allocation16 + $0x10] sm:$0xff]
    %v825 = vld [vmem:[#allocation16 + $0x18] sm:$0xff]
    %v826 = vld [vmem:[#allocation16 + $0x50] sm:$0xff]
    %v827 = vld [vmem:[#allocation16 + $0x58] sm:$0xff]
    %v828 = vld [vmem:[%s10 + $0x4] sm:$0xf]
    %v830 = vlaneseq
    %v831 = vshrl.u32 %v830, 7
    %v832 = vsub.s32 0, %v831
    %v833 = vrot.slane %v828, %v832
    %v834 = vlaneseq
    %v835 = vshrl.u32 %v834, 7
    %v836 = vsub.s32 1, %v835
    %v837 = vrot.slane %v828, %v836
    %v838 = vlaneseq
    %v839 = vshrl.u32 %v838, 7
    %v840 = vsub.s32 2, %v839
    %v841 = vrot.slane %v828, %v840
    %v842 = vlaneseq
    %v843 = vshrl.u32 %v842, 7
    %v844 = vsub.s32 3, %v843
    %v845 = vrot.slane %v828, %v844
    %v854 = vunpack.c.l.b16 %v824
    %v855 = vunpack.c.h.b16 %v824
    %v856 = vunpack.c.l.b16 %v825
    %v857 = vunpack.c.h.b16 %v825
    %v858 = vunpack.c.l.b16 %v826
    %v859 = vunpack.c.h.b16 %v826
    %v860 = vunpack.c.l.b16 %v827
    %v861 = vunpack.c.h.b16 %v827
    %v862 = vpack.c.b16 %v858, %v854
    %v863 = vpack.c.b16 %v859, %v855
    %v864 = vpack.c.b16 %v860, %v856
    %v865 = vpack.c.b16 %v861, %v857
    %870 = vmatprep.subr.bf16.mxu0 0
    %871 = vmatpush1.bf16.msra.mxu0 0
    %872 = vmatprep.subr.bf16.mxu0 0
    %873 = vmatpush1.bf16.msra.mxu0 0
    %874 = vmatprep.subr.bf16.mxu0 0
    %875 = vmatpush1.bf16.msra.mxu0 0
    %876 = vmatprep.subr.bf16.mxu0 0
    %877 = vmatpush1.bf16.msra.mxu0 0
    %878 = vmatprep.subr.bf16.mxu0 0
    %879 = vmatpush1.bf16.msra.mxu0 0
    %880 = vmatprep.subr.bf16.mxu0 0
    %881 = vmatpush1.bf16.msra.mxu0 0
    %882 = vmatprep.subr.bf16.mxu0 0
    %883 = vmatpush1.bf16.msra.mxu0 0
    %884 = vmatprep.subr.bf16.mxu0 %v863
    %885 = vmatpush1.bf16.msra.mxu0 %v862
    %886 = vmatprep.subr.bf16.mxu0 0
    %887 = vmatpush2.bf16.msra.mxu0 0
    %888 = vmatprep.subr.bf16.mxu0 0
    %889 = vmatpush2.bf16.msra.mxu0 0
    %890 = vmatprep.subr.bf16.mxu0 0
    %891 = vmatpush2.bf16.msra.mxu0 0
    %892 = vmatprep.subr.bf16.mxu0 0
    %893 = vmatpush2.bf16.msra.mxu0 0
    %894 = vmatprep.subr.bf16.mxu0 0
    %895 = vmatpush2.bf16.msra.mxu0 0
    %896 = vmatprep.subr.bf16.mxu0 0
    %897 = vmatpush2.bf16.msra.mxu0 0
    %898 = vmatprep.subr.bf16.mxu0 0
    %899 = vmatpush2.bf16.msra.mxu0 0
    %900 = vmatprep.subr.bf16.mxu0 0
    %901 = vmatpush2.bf16.msra.mxu0 0
    %902 = vmatprep.mubr.bf16.mxu0 0
    %903 = vmatmul.mubr.bf16.gmra.mxu0 %v720
    %v904 = vpop.f32.mrf.mxu0
    %v905 = vadd.f32 %v833, %v904
    %v906 = vpop.f32.mrf.mxu0
    %v907 = vadd.f32 %v837, %v906
    %v908 = vpop.f32.mrf.mxu0
    %v909 = vadd.f32 %v833, %v908
    %v910 = vpop.f32.mrf.mxu0
    %v911 = vadd.f32 %v837, %v910
    %912 = vdwg.mxu0
    %913 = vmatprep.subr.bf16.mxu0 0
    %914 = vmatpush1.bf16.msra.mxu0 0
    %915 = vmatprep.subr.bf16.mxu0 0
    %916 = vmatpush1.bf16.msra.mxu0 0
    %917 = vmatprep.subr.bf16.mxu0 0
    %918 = vmatpush1.bf16.msra.mxu0 0
    %919 = vmatprep.subr.bf16.mxu0 0
    %920 = vmatpush1.bf16.msra.mxu0 0
    %921 = vmatprep.subr.bf16.mxu0 0
    %922 = vmatpush1.bf16.msra.mxu0 0
    %923 = vmatprep.subr.bf16.mxu0 0
    %924 = vmatpush1.bf16.msra.mxu0 0
    %925 = vmatprep.subr.bf16.mxu0 0
    %926 = vmatpush1.bf16.msra.mxu0 0
    %927 = vmatprep.subr.bf16.mxu0 %v865
    %928 = vmatpush1.bf16.msra.mxu0 %v864
    %929 = vmatprep.subr.bf16.mxu0 0
    %930 = vmatpush2.bf16.msra.mxu0 0
    %931 = vmatprep.subr.bf16.mxu0 0
    %932 = vmatpush2.bf16.msra.mxu0 0
    %933 = vmatprep.subr.bf16.mxu0 0
    %934 = vmatpush2.bf16.msra.mxu0 0
    %935 = vmatprep.subr.bf16.mxu0 0
    %936 = vmatpush2.bf16.msra.mxu0 0
    %937 = vmatprep.subr.bf16.mxu0 0
    %938 = vmatpush2.bf16.msra.mxu0 0
    %939 = vmatprep.subr.bf16.mxu0 0
    %940 = vmatpush2.bf16.msra.mxu0 0
    %941 = vmatprep.subr.bf16.mxu0 0
    %942 = vmatpush2.bf16.msra.mxu0 0
    %943 = vmatprep.subr.bf16.mxu0 0
    %944 = vmatpush2.bf16.msra.mxu0 0
    %945 = vmatprep.mubr.bf16.mxu0 0
    %946 = vmatmul.mubr.bf16.gmra.mxu0 %v720
    %v947 = vpop.f32.mrf.mxu0
    %v948 = vadd.f32 %v841, %v947
    %v949 = vpop.f32.mrf.mxu0
    %v950 = vadd.f32 %v845, %v949
    %v951 = vpop.f32.mrf.mxu0
    %v952 = vadd.f32 %v841, %v951
    %v953 = vpop.f32.mrf.mxu0
    %v954 = vadd.f32 %v845, %v953
    %955 = vdwg.mxu0
    %v956 = vmax.f32 %v905, 0.0
    %v957 = vmax.f32 %v907, 0.0
    %v958 = vmax.f32 %v948, 0.0
    %v959 = vmax.f32 %v950, 0.0
    %v960 = vmax.f32 %v909, 0.0
    %v961 = vmax.f32 %v911, 0.0
    %v962 = vmax.f32 %v952, 0.0
    %v963 = vmax.f32 %v954, 0.0
    %v964 = vpack.c.bf16 %v960, %v956
    %v965 = vpack.c.bf16 %v961, %v957
    %v966 = vpack.c.bf16 %v962, %v958
    %v967 = vpack.c.bf16 %v963, %v959
    %v968 = vld [vmem:[#allocation17 + $0x10] sm:$0xff]
    %v969 = vld [vmem:[#allocation17 + $0x18] sm:$0xff]
    %v970 = vld [vmem:[#allocation17 + $0x50] sm:$0xff]
    %v971 = vld [vmem:[#allocation17 + $0x58] sm:$0xff]
    %v976 = vunpack.c.l.b16 %v968
    %v977 = vunpack.c.h.b16 %v968
    %v978 = vunpack.c.l.b16 %v969
    %v979 = vunpack.c.h.b16 %v969
    %v980 = vunpack.c.l.b16 %v970
    %v981 = vunpack.c.h.b16 %v970
    %v982 = vunpack.c.l.b16 %v971
    %v983 = vunpack.c.h.b16 %v971
    %v984 = vpack.c.b16 %v980, %v976
    %v985 = vpack.c.b16 %v981, %v977
    %v986 = vpack.c.b16 %v982, %v978
    %v987 = vpack.c.b16 %v983, %v979
    %992 = vmatprep.subr.bf16.mxu0 0
    %993 = vmatpush1.bf16.xpose.msra.mxu0 0
    %994 = vmatprep.subr.bf16.mxu0 0
    %995 = vmatpush1.bf16.xpose.msra.mxu0 0
    %996 = vmatprep.subr.bf16.mxu0 0
    %997 = vmatpush1.bf16.xpose.msra.mxu0 0
    %998 = vmatprep.subr.bf16.mxu0 0
    %999 = vmatpush1.bf16.xpose.msra.mxu0 0
    %1000 = vmatprep.subr.bf16.mxu0 0
    %1001 = vmatpush1.bf16.xpose.msra.mxu0 0
    %1002 = vmatprep.subr.bf16.mxu0 0
    %1003 = vmatpush1.bf16.xpose.msra.mxu0 0
    %1004 = vmatprep.subr.bf16.mxu0 0
    %1005 = vmatpush1.bf16.xpose.msra.mxu0 0
    %1006 = vmatprep.subr.bf16.mxu0 %v985
    %1007 = vmatpush1.bf16.xpose.msra.mxu0 %v984
    %1008 = vmatprep.subr.bf16.mxu0 0
    %1009 = vmatpush2.bf16.xpose.msra.mxu0 0
    %1010 = vmatprep.subr.bf16.mxu0 0
    %1011 = vmatpush2.bf16.xpose.msra.mxu0 0
    %1012 = vmatprep.subr.bf16.mxu0 0
    %1013 = vmatpush2.bf16.xpose.msra.mxu0 0
    %1014 = vmatprep.subr.bf16.mxu0 0
    %1015 = vmatpush2.bf16.xpose.msra.mxu0 0
    %1016 = vmatprep.subr.bf16.mxu0 0
    %1017 = vmatpush2.bf16.xpose.msra.mxu0 0
    %1018 = vmatprep.subr.bf16.mxu0 0
    %1019 = vmatpush2.bf16.xpose.msra.mxu0 0
    %1020 = vmatprep.subr.bf16.mxu0 0
    %1021 = vmatpush2.bf16.xpose.msra.mxu0 0
    %1022 = vmatprep.subr.bf16.mxu0 0
    %1023 = vmatpush2.bf16.xpose.msra.mxu0 0
    %1024 = vmatprep.mubr.bf16.mxu0 %v965
    %1025 = vmatmul.mubr.bf16.gmra.mxu0 %v964
    %v1026 = vpop.f32.mrf.mxu0
    %v1027 = vadd.f32 0.0, %v1026
    %v1028 = vpop.f32.mrf.mxu0
    %v1029 = vpop.f32.mrf.mxu0
    %v1030 = vadd.f32 0.0, %v1029
    %v1031 = vpop.f32.mrf.mxu0
    %1032 = vdwg.mxu0
    %1033 = vmatprep.subr.bf16.mxu0 0
    %1034 = vmatpush1.bf16.xpose.msra.mxu0 0
    %1035 = vmatprep.subr.bf16.mxu0 0
    %1036 = vmatpush1.bf16.xpose.msra.mxu0 0
    %1037 = vmatprep.subr.bf16.mxu0 0
    %1038 = vmatpush1.bf16.xpose.msra.mxu0 0
    %1039 = vmatprep.subr.bf16.mxu0 0
    %1040 = vmatpush1.bf16.xpose.msra.mxu0 0
    %1041 = vmatprep.subr.bf16.mxu0 0
    %1042 = vmatpush1.bf16.xpose.msra.mxu0 0
    %1043 = vmatprep.subr.bf16.mxu0 0
    %1044 = vmatpush1.bf16.xpose.msra.mxu0 0
    %1045 = vmatprep.subr.bf16.mxu0 0
    %1046 = vmatpush1.bf16.xpose.msra.mxu0 0
    %1047 = vmatprep.subr.bf16.mxu0 %v987
    %1048 = vmatpush1.bf16.xpose.msra.mxu0 %v986
    %1049 = vmatprep.subr.bf16.mxu0 0
    %1050 = vmatpush2.bf16.xpose.msra.mxu0 0
    %1051 = vmatprep.subr.bf16.mxu0 0
    %1052 = vmatpush2.bf16.xpose.msra.mxu0 0
    %1053 = vmatprep.subr.bf16.mxu0 0
    %1054 = vmatpush2.bf16.xpose.msra.mxu0 0
    %1055 = vmatprep.subr.bf16.mxu0 0
    %1056 = vmatpush2.bf16.xpose.msra.mxu0 0
    %1057 = vmatprep.subr.bf16.mxu0 0
    %1058 = vmatpush2.bf16.xpose.msra.mxu0 0
    %1059 = vmatprep.subr.bf16.mxu0 0
    %1060 = vmatpush2.bf16.xpose.msra.mxu0 0
    %1061 = vmatprep.subr.bf16.mxu0 0
    %1062 = vmatpush2.bf16.xpose.msra.mxu0 0
    %1063 = vmatprep.subr.bf16.mxu0 0
    %1064 = vmatpush2.bf16.xpose.msra.mxu0 0
    %1065 = vmatprep.mubr.bf16.mxu0 %v967
    %1066 = vmatmul.mubr.bf16.gmra.mxu0 %v966
    %v1067 = vpop.f32.mrf.mxu0
    %v1068 = vadd.f32 %v1027, %v1067
    %v1069 = vpop.f32.mrf.mxu0
    %v1070 = vpop.f32.mrf.mxu0
    %v1071 = vadd.f32 %v1030, %v1070
    %v1072 = vpop.f32.mrf.mxu0
    %1073 = vdwg.mxu0
    %v1078 = vunpack.c.l.b16 %v820
    %v1079 = vunpack.c.h.b16 %v820
    %v1080 = vunpack.c.l.b16 %v821
    %v1081 = vunpack.c.h.b16 %v821
    %v1082 = vunpack.c.l.b16 %v822
    %v1083 = vunpack.c.h.b16 %v822
    %v1084 = vunpack.c.l.b16 %v823
    %v1085 = vunpack.c.h.b16 %v823
    %v1086 = vpack.c.b16 %v1082, %v1078
    %v1087 = vpack.c.b16 %v1083, %v1079
    %v1088 = vpack.c.b16 %v1084, %v1080
    %v1089 = vpack.c.b16 %v1085, %v1081
    %1094 = vmatprep.subr.bf16.mxu0 0
    %1095 = vmatpush1.bf16.xpose.msra.mxu0 0
    %1096 = vmatprep.subr.bf16.mxu0 0
    %1097 = vmatpush1.bf16.xpose.msra.mxu0 0
    %1098 = vmatprep.subr.bf16.mxu0 0
    %1099 = vmatpush1.bf16.xpose.msra.mxu0 0
    %1100 = vmatprep.subr.bf16.mxu0 0
    %1101 = vmatpush1.bf16.xpose.msra.mxu0 0
    %1102 = vmatprep.subr.bf16.mxu0 0
    %1103 = vmatpush1.bf16.xpose.msra.mxu0 0
    %1104 = vmatprep.subr.bf16.mxu0 0
    %1105 = vmatpush1.bf16.xpose.msra.mxu0 0
    %1106 = vmatprep.subr.bf16.mxu0 0
    %1107 = vmatpush1.bf16.xpose.msra.mxu0 0
    %1108 = vmatprep.subr.bf16.mxu0 %v1087
    %1109 = vmatpush1.bf16.xpose.msra.mxu0 %v1086
    %1110 = vmatprep.subr.bf16.mxu0 0
    %1111 = vmatpush2.bf16.xpose.msra.mxu0 0
    %1112 = vmatprep.subr.bf16.mxu0 0
    %1113 = vmatpush2.bf16.xpose.msra.mxu0 0
    %1114 = vmatprep.subr.bf16.mxu0 0
    %1115 = vmatpush2.bf16.xpose.msra.mxu0 0
    %1116 = vmatprep.subr.bf16.mxu0 0
    %1117 = vmatpush2.bf16.xpose.msra.mxu0 0
    %1118 = vmatprep.subr.bf16.mxu0 0
    %1119 = vmatpush2.bf16.xpose.msra.mxu0 0
    %1120 = vmatprep.subr.bf16.mxu0 0
    %1121 = vmatpush2.bf16.xpose.msra.mxu0 0
    %1122 = vmatprep.subr.bf16.mxu0 0
    %1123 = vmatpush2.bf16.xpose.msra.mxu0 0
    %1124 = vmatprep.subr.bf16.mxu0 0
    %1125 = vmatpush2.bf16.xpose.msra.mxu0 0
    %1126 = vmatprep.mubr.bf16.mxu0 %v817
    %1127 = vmatmul.mubr.bf16.gmra.mxu0 %v816
    %v1128 = vpop.f32.mrf.mxu0
    %v1129 = vadd.f32 %v1068, %v1128
    %v1130 = vpop.f32.mrf.mxu0
    %v1131 = vpop.f32.mrf.mxu0
    %v1132 = vadd.f32 %v1071, %v1131
    %v1133 = vpop.f32.mrf.mxu0
    %1134 = vdwg.mxu0
    %1135 = vmatprep.subr.bf16.mxu0 0
    %1136 = vmatpush1.bf16.xpose.msra.mxu0 0
    %1137 = vmatprep.subr.bf16.mxu0 0
    %1138 = vmatpush1.bf16.xpose.msra.mxu0 0
    %1139 = vmatprep.subr.bf16.mxu0 0
    %1140 = vmatpush1.bf16.xpose.msra.mxu0 0
    %1141 = vmatprep.subr.bf16.mxu0 0
    %1142 = vmatpush1.bf16.xpose.msra.mxu0 0
    %1143 = vmatprep.subr.bf16.mxu0 0
    %1144 = vmatpush1.bf16.xpose.msra.mxu0 0
    %1145 = vmatprep.subr.bf16.mxu0 0
    %1146 = vmatpush1.bf16.xpose.msra.mxu0 0
    %1147 = vmatprep.subr.bf16.mxu0 0
    %1148 = vmatpush1.bf16.xpose.msra.mxu0 0
    %1149 = vmatprep.subr.bf16.mxu0 %v1089
    %1150 = vmatpush1.bf16.xpose.msra.mxu0 %v1088
    %1151 = vmatprep.subr.bf16.mxu0 0
    %1152 = vmatpush2.bf16.xpose.msra.mxu0 0
    %1153 = vmatprep.subr.bf16.mxu0 0
    %1154 = vmatpush2.bf16.xpose.msra.mxu0 0
    %1155 = vmatprep.subr.bf16.mxu0 0
    %1156 = vmatpush2.bf16.xpose.msra.mxu0 0
    %1157 = vmatprep.subr.bf16.mxu0 0
    %1158 = vmatpush2.bf16.xpose.msra.mxu0 0
    %1159 = vmatprep.subr.bf16.mxu0 0
    %1160 = vmatpush2.bf16.xpose.msra.mxu0 0
    %1161 = vmatprep.subr.bf16.mxu0 0
    %1162 = vmatpush2.bf16.xpose.msra.mxu0 0
    %1163 = vmatprep.subr.bf16.mxu0 0
    %1164 = vmatpush2.bf16.xpose.msra.mxu0 0
    %1165 = vmatprep.subr.bf16.mxu0 0
    %1166 = vmatpush2.bf16.xpose.msra.mxu0 0
    %1167 = vmatprep.mubr.bf16.mxu0 %v819
    %1168 = vmatmul.mubr.bf16.gmra.mxu0 %v818
    %v1169 = vpop.f32.mrf.mxu0
    %v1170 = vadd.f32 %v1129, %v1169
    %v1171 = vpop.f32.mrf.mxu0
    %v1172 = vpop.f32.mrf.mxu0
    %v1173 = vadd.f32 %v1132, %v1172
    %v1174 = vpop.f32.mrf.mxu0
    %1175 = vdwg.mxu0
    %v1176 = vld [vmem:[#allocation16 + $0x20] sm:$0xff]
    %v1177 = vld [vmem:[#allocation16 + $0x28] sm:$0xff]
    %v1178 = vld [vmem:[#allocation16 + $0x60] sm:$0xff]
    %v1179 = vld [vmem:[#allocation16 + $0x68] sm:$0xff]
    %v1180 = vld [vmem:[%s10 + $0x8] sm:$0xf]
    %v1182 = vlaneseq
    %v1183 = vshrl.u32 %v1182, 7
    %v1184 = vsub.s32 0, %v1183
    %v1185 = vrot.slane %v1180, %v1184
    %v1186 = vlaneseq
    %v1187 = vshrl.u32 %v1186, 7
    %v1188 = vsub.s32 1, %v1187
    %v1189 = vrot.slane %v1180, %v1188
    %v1190 = vlaneseq
    %v1191 = vshrl.u32 %v1190, 7
    %v1192 = vsub.s32 2, %v1191
    %v1193 = vrot.slane %v1180, %v1192
    %v1194 = vlaneseq
    %v1195 = vshrl.u32 %v1194, 7
    %v1196 = vsub.s32 3, %v1195
    %v1197 = vrot.slane %v1180, %v1196
    %v1206 = vunpack.c.l.b16 %v1176
    %v1207 = vunpack.c.h.b16 %v1176
    %v1208 = vunpack.c.l.b16 %v1177
    %v1209 = vunpack.c.h.b16 %v1177
    %v1210 = vunpack.c.l.b16 %v1178
    %v1211 = vunpack.c.h.b16 %v1178
    %v1212 = vunpack.c.l.b16 %v1179
    %v1213 = vunpack.c.h.b16 %v1179
    %v1214 = vpack.c.b16 %v1210, %v1206
    %v1215 = vpack.c.b16 %v1211, %v1207
    %v1216 = vpack.c.b16 %v1212, %v1208
    %v1217 = vpack.c.b16 %v1213, %v1209
    %1222 = vmatprep.subr.bf16.mxu0 0
    %1223 = vmatpush1.bf16.msra.mxu0 0
    %1224 = vmatprep.subr.bf16.mxu0 0
    %1225 = vmatpush1.bf16.msra.mxu0 0
    %1226 = vmatprep.subr.bf16.mxu0 0
    %1227 = vmatpush1.bf16.msra.mxu0 0
    %1228 = vmatprep.subr.bf16.mxu0 0
    %1229 = vmatpush1.bf16.msra.mxu0 0
    %1230 = vmatprep.subr.bf16.mxu0 0
    %1231 = vmatpush1.bf16.msra.mxu0 0
    %1232 = vmatprep.subr.bf16.mxu0 0
    %1233 = vmatpush1.bf16.msra.mxu0 0
    %1234 = vmatprep.subr.bf16.mxu0 0
    %1235 = vmatpush1.bf16.msra.mxu0 0
    %1236 = vmatprep.subr.bf16.mxu0 %v1215
    %1237 = vmatpush1.bf16.msra.mxu0 %v1214
    %1238 = vmatprep.subr.bf16.mxu0 0
    %1239 = vmatpush2.bf16.msra.mxu0 0
    %1240 = vmatprep.subr.bf16.mxu0 0
    %1241 = vmatpush2.bf16.msra.mxu0 0
    %1242 = vmatprep.subr.bf16.mxu0 0
    %1243 = vmatpush2.bf16.msra.mxu0 0
    %1244 = vmatprep.subr.bf16.mxu0 0
    %1245 = vmatpush2.bf16.msra.mxu0 0
    %1246 = vmatprep.subr.bf16.mxu0 0
    %1247 = vmatpush2.bf16.msra.mxu0 0
    %1248 = vmatprep.subr.bf16.mxu0 0
    %1249 = vmatpush2.bf16.msra.mxu0 0
    %1250 = vmatprep.subr.bf16.mxu0 0
    %1251 = vmatpush2.bf16.msra.mxu0 0
    %1252 = vmatprep.subr.bf16.mxu0 0
    %1253 = vmatpush2.bf16.msra.mxu0 0
    %1254 = vmatprep.mubr.bf16.mxu0 0
    %1255 = vmatmul.mubr.bf16.gmra.mxu0 %v720
    %v1256 = vpop.f32.mrf.mxu0
    %v1257 = vadd.f32 %v1185, %v1256
    %v1258 = vpop.f32.mrf.mxu0
    %v1259 = vadd.f32 %v1189, %v1258
    %v1260 = vpop.f32.mrf.mxu0
    %v1261 = vadd.f32 %v1185, %v1260
    %v1262 = vpop.f32.mrf.mxu0
    %v1263 = vadd.f32 %v1189, %v1262
    %1264 = vdwg.mxu0
    %1265 = vmatprep.subr.bf16.mxu0 0
    %1266 = vmatpush1.bf16.msra.mxu0 0
    %1267 = vmatprep.subr.bf16.mxu0 0
    %1268 = vmatpush1.bf16.msra.mxu0 0
    %1269 = vmatprep.subr.bf16.mxu0 0
    %1270 = vmatpush1.bf16.msra.mxu0 0
    %1271 = vmatprep.subr.bf16.mxu0 0
    %1272 = vmatpush1.bf16.msra.mxu0 0
    %1273 = vmatprep.subr.bf16.mxu0 0
    %1274 = vmatpush1.bf16.msra.mxu0 0
    %1275 = vmatprep.subr.bf16.mxu0 0
    %1276 = vmatpush1.bf16.msra.mxu0 0
    %1277 = vmatprep.subr.bf16.mxu0 0
    %1278 = vmatpush1.bf16.msra.mxu0 0
    %1279 = vmatprep.subr.bf16.mxu0 %v1217
    %1280 = vmatpush1.bf16.msra.mxu0 %v1216
    %1281 = vmatprep.subr.bf16.mxu0 0
    %1282 = vmatpush2.bf16.msra.mxu0 0
    %1283 = vmatprep.subr.bf16.mxu0 0
    %1284 = vmatpush2.bf16.msra.mxu0 0
    %1285 = vmatprep.subr.bf16.mxu0 0
    %1286 = vmatpush2.bf16.msra.mxu0 0
    %1287 = vmatprep.subr.bf16.mxu0 0
    %1288 = vmatpush2.bf16.msra.mxu0 0
    %1289 = vmatprep.subr.bf16.mxu0 0
    %1290 = vmatpush2.bf16.msra.mxu0 0
    %1291 = vmatprep.subr.bf16.mxu0 0
    %1292 = vmatpush2.bf16.msra.mxu0 0
    %1293 = vmatprep.subr.bf16.mxu0 0
    %1294 = vmatpush2.bf16.msra.mxu0 0
    %1295 = vmatprep.subr.bf16.mxu0 0
    %1296 = vmatpush2.bf16.msra.mxu0 0
    %1297 = vmatprep.mubr.bf16.mxu0 0
    %1298 = vmatmul.mubr.bf16.gmra.mxu0 %v720
    %v1299 = vpop.f32.mrf.mxu0
    %v1300 = vadd.f32 %v1193, %v1299
    %v1301 = vpop.f32.mrf.mxu0
    %v1302 = vadd.f32 %v1197, %v1301
    %v1303 = vpop.f32.mrf.mxu0
    %v1304 = vadd.f32 %v1193, %v1303
    %v1305 = vpop.f32.mrf.mxu0
    %v1306 = vadd.f32 %v1197, %v1305
    %1307 = vdwg.mxu0
    %v1308 = vmax.f32 %v1257, 0.0
    %v1309 = vmax.f32 %v1259, 0.0
    %v1310 = vmax.f32 %v1300, 0.0
    %v1311 = vmax.f32 %v1302, 0.0
    %v1312 = vmax.f32 %v1261, 0.0
    %v1313 = vmax.f32 %v1263, 0.0
    %v1314 = vmax.f32 %v1304, 0.0
    %v1315 = vmax.f32 %v1306, 0.0
    %v1316 = vpack.c.bf16 %v1312, %v1308
    %v1317 = vpack.c.bf16 %v1313, %v1309
    %v1318 = vpack.c.bf16 %v1314, %v1310
    %v1319 = vpack.c.bf16 %v1315, %v1311
    %v1320 = vld [vmem:[#allocation17 + $0x20] sm:$0xff]
    %v1321 = vld [vmem:[#allocation17 + $0x28] sm:$0xff]
    %v1322 = vld [vmem:[#allocation17 + $0x60] sm:$0xff]
    %v1323 = vld [vmem:[#allocation17 + $0x68] sm:$0xff]
    %v1328 = vunpack.c.l.b16 %v1320
    %v1329 = vunpack.c.h.b16 %v1320
    %v1330 = vunpack.c.l.b16 %v1321
    %v1331 = vunpack.c.h.b16 %v1321
    %v1332 = vunpack.c.l.b16 %v1322
    %v1333 = vunpack.c.h.b16 %v1322
    %v1334 = vunpack.c.l.b16 %v1323
    %v1335 = vunpack.c.h.b16 %v1323
    %v1336 = vpack.c.b16 %v1332, %v1328
    %v1337 = vpack.c.b16 %v1333, %v1329
    %v1338 = vpack.c.b16 %v1334, %v1330
    %v1339 = vpack.c.b16 %v1335, %v1331
    %1344 = vmatprep.subr.bf16.mxu0 0
    %1345 = vmatpush1.bf16.xpose.msra.mxu0 0
    %1346 = vmatprep.subr.bf16.mxu0 0
    %1347 = vmatpush1.bf16.xpose.msra.mxu0 0
    %1348 = vmatprep.subr.bf16.mxu0 0
    %1349 = vmatpush1.bf16.xpose.msra.mxu0 0
    %1350 = vmatprep.subr.bf16.mxu0 0
    %1351 = vmatpush1.bf16.xpose.msra.mxu0 0
    %1352 = vmatprep.subr.bf16.mxu0 0
    %1353 = vmatpush1.bf16.xpose.msra.mxu0 0
    %1354 = vmatprep.subr.bf16.mxu0 0
    %1355 = vmatpush1.bf16.xpose.msra.mxu0 0
    %1356 = vmatprep.subr.bf16.mxu0 0
    %1357 = vmatpush1.bf16.xpose.msra.mxu0 0
    %1358 = vmatprep.subr.bf16.mxu0 %v1337
    %1359 = vmatpush1.bf16.xpose.msra.mxu0 %v1336
    %1360 = vmatprep.subr.bf16.mxu0 0
    %1361 = vmatpush2.bf16.xpose.msra.mxu0 0
    %1362 = vmatprep.subr.bf16.mxu0 0
    %1363 = vmatpush2.bf16.xpose.msra.mxu0 0
    %1364 = vmatprep.subr.bf16.mxu0 0
    %1365 = vmatpush2.bf16.xpose.msra.mxu0 0
    %1366 = vmatprep.subr.bf16.mxu0 0
    %1367 = vmatpush2.bf16.xpose.msra.mxu0 0
    %1368 = vmatprep.subr.bf16.mxu0 0
    %1369 = vmatpush2.bf16.xpose.msra.mxu0 0
    %1370 = vmatprep.subr.bf16.mxu0 0
    %1371 = vmatpush2.bf16.xpose.msra.mxu0 0
    %1372 = vmatprep.subr.bf16.mxu0 0
    %1373 = vmatpush2.bf16.xpose.msra.mxu0 0
    %1374 = vmatprep.subr.bf16.mxu0 0
    %1375 = vmatpush2.bf16.xpose.msra.mxu0 0
    %1376 = vmatprep.mubr.bf16.mxu0 %v1317
    %1377 = vmatmul.mubr.bf16.gmra.mxu0 %v1316
    %v1378 = vpop.f32.mrf.mxu0
    %v1379 = vadd.f32 0.0, %v1378
    %v1380 = vpop.f32.mrf.mxu0
    %v1381 = vpop.f32.mrf.mxu0
    %v1382 = vadd.f32 0.0, %v1381
    %v1383 = vpop.f32.mrf.mxu0
    %1384 = vdwg.mxu0
    %1385 = vmatprep.subr.bf16.mxu0 0
    %1386 = vmatpush1.bf16.xpose.msra.mxu0 0
    %1387 = vmatprep.subr.bf16.mxu0 0
    %1388 = vmatpush1.bf16.xpose.msra.mxu0 0
    %1389 = vmatprep.subr.bf16.mxu0 0
    %1390 = vmatpush1.bf16.xpose.msra.mxu0 0
    %1391 = vmatprep.subr.bf16.mxu0 0
    %1392 = vmatpush1.bf16.xpose.msra.mxu0 0
    %1393 = vmatprep.subr.bf16.mxu0 0
    %1394 = vmatpush1.bf16.xpose.msra.mxu0 0
    %1395 = vmatprep.subr.bf16.mxu0 0
    %1396 = vmatpush1.bf16.xpose.msra.mxu0 0
    %1397 = vmatprep.subr.bf16.mxu0 0
    %1398 = vmatpush1.bf16.xpose.msra.mxu0 0
    %1399 = vmatprep.subr.bf16.mxu0 %v1339
    %1400 = vmatpush1.bf16.xpose.msra.mxu0 %v1338
    %1401 = vmatprep.subr.bf16.mxu0 0
    %1402 = vmatpush2.bf16.xpose.msra.mxu0 0
    %1403 = vmatprep.subr.bf16.mxu0 0
    %1404 = vmatpush2.bf16.xpose.msra.mxu0 0
    %1405 = vmatprep.subr.bf16.mxu0 0
    %1406 = vmatpush2.bf16.xpose.msra.mxu0 0
    %1407 = vmatprep.subr.bf16.mxu0 0
    %1408 = vmatpush2.bf16.xpose.msra.mxu0 0
    %1409 = vmatprep.subr.bf16.mxu0 0
    %1410 = vmatpush2.bf16.xpose.msra.mxu0 0
    %1411 = vmatprep.subr.bf16.mxu0 0
    %1412 = vmatpush2.bf16.xpose.msra.mxu0 0
    %1413 = vmatprep.subr.bf16.mxu0 0
    %1414 = vmatpush2.bf16.xpose.msra.mxu0 0
    %1415 = vmatprep.subr.bf16.mxu0 0
    %1416 = vmatpush2.bf16.xpose.msra.mxu0 0
    %1417 = vmatprep.mubr.bf16.mxu0 %v1319
    %1418 = vmatmul.mubr.bf16.gmra.mxu0 %v1318
    %v1419 = vpop.f32.mrf.mxu0
    %v1420 = vadd.f32 %v1379, %v1419
    %v1421 = vpop.f32.mrf.mxu0
    %v1422 = vpop.f32.mrf.mxu0
    %v1423 = vadd.f32 %v1382, %v1422
    %v1424 = vpop.f32.mrf.mxu0
    %1425 = vdwg.mxu0
    %v1426 = vadd.f32 %v1170, %v1420
    %v1427 = vadd.f32 %v1173, %v1423
    %v1428 = vld [vmem:[#allocation16 + $0x30] sm:$0xff]
    %v1429 = vld [vmem:[#allocation16 + $0x38] sm:$0xff]
    %v1430 = vld [vmem:[#allocation16 + $0x70] sm:$0xff]
    %v1431 = vld [vmem:[#allocation16 + $0x78] sm:$0xff]
    %v1432 = vld [vmem:[%s10 + $0xc] sm:$0xf]
    %v1434 = vlaneseq
    %v1435 = vshrl.u32 %v1434, 7
    %v1436 = vsub.s32 0, %v1435
    %v1437 = vrot.slane %v1432, %v1436
    %v1438 = vlaneseq
    %v1439 = vshrl.u32 %v1438, 7
    %v1440 = vsub.s32 1, %v1439
    %v1441 = vrot.slane %v1432, %v1440
    %v1442 = vlaneseq
    %v1443 = vshrl.u32 %v1442, 7
    %v1444 = vsub.s32 2, %v1443
    %v1445 = vrot.slane %v1432, %v1444
    %v1446 = vlaneseq
    %v1447 = vshrl.u32 %v1446, 7
    %v1448 = vsub.s32 3, %v1447
    %v1449 = vrot.slane %v1432, %v1448
    %v1458 = vunpack.c.l.b16 %v1428
    %v1459 = vunpack.c.h.b16 %v1428
    %v1460 = vunpack.c.l.b16 %v1429
    %v1461 = vunpack.c.h.b16 %v1429
    %v1462 = vunpack.c.l.b16 %v1430
    %v1463 = vunpack.c.h.b16 %v1430
    %v1464 = vunpack.c.l.b16 %v1431
    %v1465 = vunpack.c.h.b16 %v1431
    %v1466 = vpack.c.b16 %v1462, %v1458
    %v1467 = vpack.c.b16 %v1463, %v1459
    %v1468 = vpack.c.b16 %v1464, %v1460
    %v1469 = vpack.c.b16 %v1465, %v1461
    %1474 = vmatprep.subr.bf16.mxu0 0
    %1475 = vmatpush1.bf16.msra.mxu0 0
    %1476 = vmatprep.subr.bf16.mxu0 0
    %1477 = vmatpush1.bf16.msra.mxu0 0
    %1478 = vmatprep.subr.bf16.mxu0 0
    %1479 = vmatpush1.bf16.msra.mxu0 0
    %1480 = vmatprep.subr.bf16.mxu0 0
    %1481 = vmatpush1.bf16.msra.mxu0 0
    %1482 = vmatprep.subr.bf16.mxu0 0
    %1483 = vmatpush1.bf16.msra.mxu0 0
    %1484 = vmatprep.subr.bf16.mxu0 0
    %1485 = vmatpush1.bf16.msra.mxu0 0
    %1486 = vmatprep.subr.bf16.mxu0 0
    %1487 = vmatpush1.bf16.msra.mxu0 0
    %1488 = vmatprep.subr.bf16.mxu0 %v1467
    %1489 = vmatpush1.bf16.msra.mxu0 %v1466
    %1490 = vmatprep.subr.bf16.mxu0 0
    %1491 = vmatpush2.bf16.msra.mxu0 0
    %1492 = vmatprep.subr.bf16.mxu0 0
    %1493 = vmatpush2.bf16.msra.mxu0 0
    %1494 = vmatprep.subr.bf16.mxu0 0
    %1495 = vmatpush2.bf16.msra.mxu0 0
    %1496 = vmatprep.subr.bf16.mxu0 0
    %1497 = vmatpush2.bf16.msra.mxu0 0
    %1498 = vmatprep.subr.bf16.mxu0 0
    %1499 = vmatpush2.bf16.msra.mxu0 0
    %1500 = vmatprep.subr.bf16.mxu0 0
    %1501 = vmatpush2.bf16.msra.mxu0 0
    %1502 = vmatprep.subr.bf16.mxu0 0
    %1503 = vmatpush2.bf16.msra.mxu0 0
    %1504 = vmatprep.subr.bf16.mxu0 0
    %1505 = vmatpush2.bf16.msra.mxu0 0
    %1506 = vmatprep.mubr.bf16.mxu0 0
    %1507 = vmatmul.mubr.bf16.gmra.mxu0 %v720
    %v1508 = vpop.f32.mrf.mxu0
    %v1509 = vadd.f32 %v1437, %v1508
    %v1510 = vpop.f32.mrf.mxu0
    %v1511 = vadd.f32 %v1441, %v1510
    %v1512 = vpop.f32.mrf.mxu0
    %v1513 = vadd.f32 %v1437, %v1512
    %v1514 = vpop.f32.mrf.mxu0
    %v1515 = vadd.f32 %v1441, %v1514
    %1516 = vdwg.mxu0
    %1517 = vmatprep.subr.bf16.mxu0 0
    %1518 = vmatpush1.bf16.msra.mxu0 0
    %1519 = vmatprep.subr.bf16.mxu0 0
    %1520 = vmatpush1.bf16.msra.mxu0 0
    %1521 = vmatprep.subr.bf16.mxu0 0
    %1522 = vmatpush1.bf16.msra.mxu0 0
    %1523 = vmatprep.subr.bf16.mxu0 0
    %1524 = vmatpush1.bf16.msra.mxu0 0
    %1525 = vmatprep.subr.bf16.mxu0 0
    %1526 = vmatpush1.bf16.msra.mxu0 0
    %1527 = vmatprep.subr.bf16.mxu0 0
    %1528 = vmatpush1.bf16.msra.mxu0 0
    %1529 = vmatprep.subr.bf16.mxu0 0
    %1530 = vmatpush1.bf16.msra.mxu0 0
    %1531 = vmatprep.subr.bf16.mxu0 %v1469
    %1532 = vmatpush1.bf16.msra.mxu0 %v1468
    %1533 = vmatprep.subr.bf16.mxu0 0
    %1534 = vmatpush2.bf16.msra.mxu0 0
    %1535 = vmatprep.subr.bf16.mxu0 0
    %1536 = vmatpush2.bf16.msra.mxu0 0
    %1537 = vmatprep.subr.bf16.mxu0 0
    %1538 = vmatpush2.bf16.msra.mxu0 0
    %1539 = vmatprep.subr.bf16.mxu0 0
    %1540 = vmatpush2.bf16.msra.mxu0 0
    %1541 = vmatprep.subr.bf16.mxu0 0
    %1542 = vmatpush2.bf16.msra.mxu0 0
    %1543 = vmatprep.subr.bf16.mxu0 0
    %1544 = vmatpush2.bf16.msra.mxu0 0
    %1545 = vmatprep.subr.bf16.mxu0 0
    %1546 = vmatpush2.bf16.msra.mxu0 0
    %1547 = vmatprep.subr.bf16.mxu0 0
    %1548 = vmatpush2.bf16.msra.mxu0 0
    %1549 = vmatprep.mubr.bf16.mxu0 0
    %1550 = vmatmul.mubr.bf16.gmra.mxu0 %v720
    %v1551 = vpop.f32.mrf.mxu0
    %v1552 = vadd.f32 %v1445, %v1551
    %v1553 = vpop.f32.mrf.mxu0
    %v1554 = vadd.f32 %v1449, %v1553
    %v1555 = vpop.f32.mrf.mxu0
    %v1556 = vadd.f32 %v1445, %v1555
    %v1557 = vpop.f32.mrf.mxu0
    %v1558 = vadd.f32 %v1449, %v1557
    %1559 = vdwg.mxu0
    %v1560 = vmax.f32 %v1509, 0.0
    %v1561 = vmax.f32 %v1511, 0.0
    %v1562 = vmax.f32 %v1552, 0.0
    %v1563 = vmax.f32 %v1554, 0.0
    %v1564 = vmax.f32 %v1513, 0.0
    %v1565 = vmax.f32 %v1515, 0.0
    %v1566 = vmax.f32 %v1556, 0.0
    %v1567 = vmax.f32 %v1558, 0.0
    %v1568 = vpack.c.bf16 %v1564, %v1560
    %v1569 = vpack.c.bf16 %v1565, %v1561
    %v1570 = vpack.c.bf16 %v1566, %v1562
    %v1571 = vpack.c.bf16 %v1567, %v1563
    %v1572 = vld [vmem:[#allocation17 + $0x30] sm:$0xff]
    %v1573 = vld [vmem:[#allocation17 + $0x38] sm:$0xff]
    %v1574 = vld [vmem:[#allocation17 + $0x70] sm:$0xff]
    %v1575 = vld [vmem:[#allocation17 + $0x78] sm:$0xff]
    %v1580 = vunpack.c.l.b16 %v1572
    %v1581 = vunpack.c.h.b16 %v1572
    %v1582 = vunpack.c.l.b16 %v1573
    %v1583 = vunpack.c.h.b16 %v1573
    %v1584 = vunpack.c.l.b16 %v1574
    %v1585 = vunpack.c.h.b16 %v1574
    %v1586 = vunpack.c.l.b16 %v1575
    %v1587 = vunpack.c.h.b16 %v1575
    %v1588 = vpack.c.b16 %v1584, %v1580
    %v1589 = vpack.c.b16 %v1585, %v1581
    %v1590 = vpack.c.b16 %v1586, %v1582
    %v1591 = vpack.c.b16 %v1587, %v1583
    %1596 = vmatprep.subr.bf16.mxu0 0
    %1597 = vmatpush1.bf16.xpose.msra.mxu0 0
    %1598 = vmatprep.subr.bf16.mxu0 0
    %1599 = vmatpush1.bf16.xpose.msra.mxu0 0
    %1600 = vmatprep.subr.bf16.mxu0 0
    %1601 = vmatpush1.bf16.xpose.msra.mxu0 0
    %1602 = vmatprep.subr.bf16.mxu0 0
    %1603 = vmatpush1.bf16.xpose.msra.mxu0 0
    %1604 = vmatprep.subr.bf16.mxu0 0
    %1605 = vmatpush1.bf16.xpose.msra.mxu0 0
    %1606 = vmatprep.subr.bf16.mxu0 0
    %1607 = vmatpush1.bf16.xpose.msra.mxu0 0
    %1608 = vmatprep.subr.bf16.mxu0 0
    %1609 = vmatpush1.bf16.xpose.msra.mxu0 0
    %1610 = vmatprep.subr.bf16.mxu0 %v1589
    %1611 = vmatpush1.bf16.xpose.msra.mxu0 %v1588
    %1612 = vmatprep.subr.bf16.mxu0 0
    %1613 = vmatpush2.bf16.xpose.msra.mxu0 0
    %1614 = vmatprep.subr.bf16.mxu0 0
    %1615 = vmatpush2.bf16.xpose.msra.mxu0 0
    %1616 = vmatprep.subr.bf16.mxu0 0
    %1617 = vmatpush2.bf16.xpose.msra.mxu0 0
    %1618 = vmatprep.subr.bf16.mxu0 0
    %1619 = vmatpush2.bf16.xpose.msra.mxu0 0
    %1620 = vmatprep.subr.bf16.mxu0 0
    %1621 = vmatpush2.bf16.xpose.msra.mxu0 0
    %1622 = vmatprep.subr.bf16.mxu0 0
    %1623 = vmatpush2.bf16.xpose.msra.mxu0 0
    %1624 = vmatprep.subr.bf16.mxu0 0
    %1625 = vmatpush2.bf16.xpose.msra.mxu0 0
    %1626 = vmatprep.subr.bf16.mxu0 0
    %1627 = vmatpush2.bf16.xpose.msra.mxu0 0
    %1628 = vmatprep.mubr.bf16.mxu0 %v1569
    %1629 = vmatmul.mubr.bf16.gmra.mxu0 %v1568
    %v1630 = vpop.f32.mrf.mxu0
    %v1631 = vadd.f32 0.0, %v1630
    %v1632 = vpop.f32.mrf.mxu0
    %v1633 = vpop.f32.mrf.mxu0
    %v1634 = vadd.f32 0.0, %v1633
    %v1635 = vpop.f32.mrf.mxu0
    %1636 = vdwg.mxu0
    %1637 = vmatprep.subr.bf16.mxu0 0
    %1638 = vmatpush1.bf16.xpose.msra.mxu0 0
    %1639 = vmatprep.subr.bf16.mxu0 0
    %1640 = vmatpush1.bf16.xpose.msra.mxu0 0
    %1641 = vmatprep.subr.bf16.mxu0 0
    %1642 = vmatpush1.bf16.xpose.msra.mxu0 0
    %1643 = vmatprep.subr.bf16.mxu0 0
    %1644 = vmatpush1.bf16.xpose.msra.mxu0 0
    %1645 = vmatprep.subr.bf16.mxu0 0
    %1646 = vmatpush1.bf16.xpose.msra.mxu0 0
    %1647 = vmatprep.subr.bf16.mxu0 0
    %1648 = vmatpush1.bf16.xpose.msra.mxu0 0
    %1649 = vmatprep.subr.bf16.mxu0 0
    %1650 = vmatpush1.bf16.xpose.msra.mxu0 0
    %1651 = vmatprep.subr.bf16.mxu0 %v1591
    %1652 = vmatpush1.bf16.xpose.msra.mxu0 %v1590
    %1653 = vmatprep.subr.bf16.mxu0 0
    %1654 = vmatpush2.bf16.xpose.msra.mxu0 0
    %1655 = vmatprep.subr.bf16.mxu0 0
    %1656 = vmatpush2.bf16.xpose.msra.mxu0 0
    %1657 = vmatprep.subr.bf16.mxu0 0
    %1658 = vmatpush2.bf16.xpose.msra.mxu0 0
    %1659 = vmatprep.subr.bf16.mxu0 0
    %1660 = vmatpush2.bf16.xpose.msra.mxu0 0
    %1661 = vmatprep.subr.bf16.mxu0 0
    %1662 = vmatpush2.bf16.xpose.msra.mxu0 0
    %1663 = vmatprep.subr.bf16.mxu0 0
    %1664 = vmatpush2.bf16.xpose.msra.mxu0 0
    %1665 = vmatprep.subr.bf16.mxu0 0
    %1666 = vmatpush2.bf16.xpose.msra.mxu0 0
    %1667 = vmatprep.subr.bf16.mxu0 0
    %1668 = vmatpush2.bf16.xpose.msra.mxu0 0
    %1669 = vmatprep.mubr.bf16.mxu0 %v1571
    %1670 = vmatmul.mubr.bf16.gmra.mxu0 %v1570
    %v1671 = vpop.f32.mrf.mxu0
    %v1672 = vadd.f32 %v1631, %v1671
    %v1673 = vpop.f32.mrf.mxu0
    %v1674 = vpop.f32.mrf.mxu0
    %v1675 = vadd.f32 %v1634, %v1674
    %v1676 = vpop.f32.mrf.mxu0
    %1677 = vdwg.mxu0
    %v1678 = vadd.f32 %v1426, %v1672
    %v1679 = vadd.f32 %v1427, %v1675
    %v1680 = vld [vmem:[#allocation19] sm:$0x1]
    %v1682 = vlaneseq
    %v1683 = vshrl.u32 %v1682, 7
    %v1684 = vsub.s32 0, %v1683
    %v1685 = vrot.slane %v1680, %v1684
    %v1687 = vadd.f32 %v1678, %v1685
    %v1688 = vadd.f32 %v1679, %v1685
    %v1689 = vadd.f32 %v670, %v1687
    %v1690 = vadd.f32 %v671, %v1688
    %v1691 = vld [vmem:[%s15] sm:$0x1]
    %v1692 = vld [vmem:[%s16] sm:$0x1]
    %v1693 = vsel %vm246, %v1689, 0.0
    %1694 = vadd.xlane.f32.xlu0 %v1693
    %v1695 = vpop.xlane.xlu0 %1694
    %v1696 = vsel %vm246, %v1690, 0.0
    %1697 = vadd.xlane.f32.xlu0 %v1696
    %v1698 = vpop.xlane.xlu0 %1697
    %v1699 = vmul.f32 %v1695, %v635
    %v1700 = vmul.f32 %v1698, %v635
    %v1701 = vsub.f32 %v1689, %v1699
    %v1702 = vsub.f32 %v1690, %v1700
    %v1703 = vmul.f32 %v1701, %v1701
    %v1704 = vmul.f32 %v1702, %v1702
    %v1705 = vsel %vm246, %v1703, 0.0
    %1706 = vadd.xlane.f32.xlu0 %v1705
    %v1707 = vpop.xlane.xlu0 %1706
    %v1708 = vsel %vm246, %v1704, 0.0
    %1709 = vadd.xlane.f32.xlu0 %v1708
    %v1710 = vpop.xlane.xlu0 %1709
    %v1711 = vmul.f32 %v1707, %v635
    %v1712 = vmul.f32 %v1710, %v635
    %v1713 = vadd.f32 %v1711, 1e-05
    %v1714 = vadd.f32 %v1712, 1e-05
    %v1715 = vrsqrt.pop %v1713
    %v1716 = vrsqrt.pop %v1714
    %v1717 = vmul.f32 %v1701, %v1715
    %v1718 = vmul.f32 %v1702, %v1716
    %v1720 = vlaneseq
    %v1721 = vshrl.u32 %v1720, 7
    %v1722 = vsub.s32 0, %v1721
    %v1723 = vrot.slane %v1691, %v1722
    %v1725 = vmul.f32 %v1717, %v1723
    %v1726 = vmul.f32 %v1718, %v1723
    %v1728 = vlaneseq
    %v1729 = vshrl.u32 %v1728, 7
    %v1730 = vsub.s32 0, %v1729
    %v1731 = vrot.slane %v1692, %v1730
    %v1733 = vadd.f32 %v1725, %v1731
    %v1734 = vadd.f32 %v1726, %v1731
    %v1735 = vpack.c.bf16 %v1734, %v1733
    %v1736 = vld [vmem:[%s17] sm:$0xf]
    %v1737 = vld [vmem:[%s17 + $0x4] sm:$0xf]
    %v1738 = vld [vmem:[%s18] sm:$0x1]
    %v1740 = vlaneseq
    %v1741 = vshrl.u32 %v1740, 7
    %v1742 = vsub.s32 0, %v1741
    %v1743 = vrot.slane %v1738, %v1742
    %v1747 = vunpack.c.l.b16 %v1736
    %v1748 = vunpack.c.l.b16 %v1737
    %v1749 = vpack.c.b16 %v1748, %v1747
    %v1752 = vsel %vm246, %v1735, 0
    %1754 = vmatprep.subr.bf16.mxu0 0
    %1755 = vmatpush1.bf16.msra.mxu0 0
    %1756 = vmatprep.subr.bf16.mxu0 0
    %1757 = vmatpush1.bf16.msra.mxu0 0
    %1758 = vmatprep.subr.bf16.mxu0 0
    %1759 = vmatpush1.bf16.msra.mxu0 0
    %1760 = vmatprep.subr.bf16.mxu0 0
    %1761 = vmatpush1.bf16.msra.mxu0 0
    %1762 = vmatprep.subr.bf16.mxu0 0
    %1763 = vmatpush1.bf16.msra.mxu0 0
    %1764 = vmatprep.subr.bf16.mxu0 0
    %1765 = vmatpush1.bf16.msra.mxu0 0
    %1766 = vmatprep.subr.bf16.mxu0 0
    %1767 = vmatpush1.bf16.msra.mxu0 0
    %1768 = vmatprep.subr.bf16.mxu0 0
    %1769 = vmatpush1.bf16.msra.mxu0 %v1749
    %1770 = vmatprep.subr.bf16.mxu0 0
    %1771 = vmatpush2.bf16.msra.mxu0 0
    %1772 = vmatprep.subr.bf16.mxu0 0
    %1773 = vmatpush2.bf16.msra.mxu0 0
    %1774 = vmatprep.subr.bf16.mxu0 0
    %1775 = vmatpush2.bf16.msra.mxu0 0
    %1776 = vmatprep.subr.bf16.mxu0 0
    %1777 = vmatpush2.bf16.msra.mxu0 0
    %1778 = vmatprep.subr.bf16.mxu0 0
    %1779 = vmatpush2.bf16.msra.mxu0 0
    %1780 = vmatprep.subr.bf16.mxu0 0
    %1781 = vmatpush2.bf16.msra.mxu0 0
    %1782 = vmatprep.subr.bf16.mxu0 0
    %1783 = vmatpush2.bf16.msra.mxu0 0
    %1784 = vmatprep.subr.bf16.mxu0 0
    %1785 = vmatpush2.bf16.msra.mxu0 0
    %1786 = vmatprep.mubr.bf16.mxu0 0
    %1787 = vmatmul.mubr.bf16.gmra.mxu0 %v1752
    %v1788 = vpop.f32.mrf.mxu0
    %v1789 = vadd.f32 %v1743, %v1788
    %v1790 = vpop.f32.mrf.mxu0
    %v1791 = vpop.f32.mrf.mxu0
    %v1792 = vadd.f32 %v1743, %v1791
    %v1793 = vpop.f32.mrf.mxu0
    %1794 = vdwg.mxu0
    %v1795 = vxor.u32 %v1789, 2147483648
    %v1796 = vxor.u32 %v1792, 2147483648
    %v1797 = vmul.f32 %v1795, 1.442695
    %v1798 = vpow.pop %v1797
    %v1799 = vmul.f32 %v1796, 1.442695
    %v1800 = vpow.pop %v1799
    %v1801 = vadd.f32 %v1798, 1.0
    %v1802 = vadd.f32 %v1800, 1.0
    %v1803 = vrcp.pop %v1801
    %v1804 = vmul.f32 1.0, %v1803
    %v1805 = vrcp.pop %v1802
    %v1806 = vmul.f32 1.0, %v1805
    %1807 = vst [vmem:[#allocation23] sm:$0xff] %v1804
    %1808 = vst [vmem:[#allocation23 + $0x8] sm:$0xff] %v1806
    // Predicated region
    $region130: #{tpu_custom_call.1} parent=1 // pred_check
      _
    $region131: #{tpu_custom_call.1} parent=1 // pred_check_branch
      %1810 = sbr.rel (0) target = $region133
    $region132: #{tpu_custom_call.1} parent=1 // pred_region
      %s1812 = ssub.s32 256, 256
      %1813 = vsyncadd [#allocation4], %s1812
      %s1814 = sshll.u32 [#allocation23], 4
      %s1815 = int_to_ptr.vmem [resolvable:$true] %s1814
      %1820 = dma.vmem_to_hbm [thread:$0]  %s1815, 256, %s19, [#allocation4], 128, 128, 8
    $region133: #{tpu_custom_call.1} parent=1 // pred_fallthru
      _
    // Predicated region
    $region134: #{tpu_custom_call.1} parent=1 // pred_check
      _
    $region135: #{tpu_custom_call.1} parent=1 // pred_check_branch
      %1822 = sbr.rel (0) target = $region137
    $region136: #{tpu_custom_call.1} parent=1 // pred_region
      %1823 = dma.done [#allocation4], 256
    $region137: #{tpu_custom_call.1} parent=1 // pred_fallthru
      _
    %1824 = vsyncpa [#allocation3], 1
    %1825 = vsyncpa [#allocation6], 1
    %1826 = vsyncpa [#allocation9], 1
    %1827 = vsyncpa [#allocation12], 1
    %1828 = vsyncpa [#allocation15], 1
    %1829 = vsyncpa [#allocation18], 1
    %1830 = vsyncpa [#allocation21], 1
    %1831 = vsyncpa [#allocation4], 1

</llo_original>
